<compile_context>
chip_gen: v5e
topology: v5e:2x2
jax: 0.10.0
libtpu: 0.0.40
codegen_flags: <defaults>
</compile_context>

<pallas_src>
import functools
import math

import jax
import jax.numpy as jnp
from jax.experimental import pallas as pl
from jax.experimental.pallas import tpu as pltpu

# ----------------------------- config ---------------------------------------
VOCAB_SIZE = 128
TYPE_VOCAB_SIZE = 2
MAX_POS = 32
HIDDEN = 32            # config.hidden_size (scaled down from 768)
NUM_HEADS = 2
HEAD_DIM = HIDDEN // NUM_HEADS
INTERMEDIATE = 64
NUM_LAYERS = 2
NUM_LABELS = 3
LN_EPS = 1e-12
LOGITS_PAD = 128       # lane-dense output width

BATCH = 2
SEQ = 8


# ----------------------------- in-kernel helpers ----------------------------
def _ln(x, g, b):
    mean = jnp.mean(x, axis=-1, keepdims=True)
    xc = x - mean
    var = jnp.mean(xc * xc, axis=-1, keepdims=True)
    return xc * jax.lax.rsqrt(var + LN_EPS) * g + b


def _gelu(x):
    # tanh-approx GELU (EUP-friendly). HF BERT uses the erf form; diffs ~1e-3.
    return 0.5 * x * (1.0 + jnp.tanh(0.7978845608028654 * (x + 0.044715 * x * x * x)))


# ----------------------------- fused kernel ---------------------------------
def _bert_fused_kernel(ids_ref, bias_ref, wemb_ref, postype_ref,
                       wqkv_ref, bqkv_ref, wout_ref, wffn_ref, b1_ref,
                       lvec_ref, gvec_ref, wpre_ref, wcls_ref, bcls_ref,
                       out_ref, *, batch, seq):
    n_tok = batch * seq

    # ---- embeddings: one-hot matmul (MXU) + pre-tiled pos/type + LayerNorm --
    ids = ids_ref[...]                                              # (n_tok, 1) int32
    vocab_iota = jax.lax.broadcasted_iota(jnp.int32, (n_tok, VOCAB_SIZE), 1)
    onehot = (vocab_iota == ids).astype(jnp.float32)                # (n_tok, V)
    h = jnp.dot(onehot, wemb_ref[...], preferred_element_type=jnp.float32)
    h = h + postype_ref[...]                                        # pre-tiled (n_tok, H)
    h = _ln(h, gvec_ref[0], gvec_ref[1])

    # block-diagonal (same-batch) + key-padding additive bias, (n_tok, n_tok)
    attn_bias = bias_ref[...]

    # ---- encoder layers (unrolled; all weights resident in VMEM) ------------
    for li in range(NUM_LAYERS):
        attn = None
        for hh in range(NUM_HEADS):
            iq = (li * 3 + 0) * NUM_HEADS + hh
            ik = (li * 3 + 1) * NUM_HEADS + hh
            iv = (li * 3 + 2) * NUM_HEADS + hh
            # per-head projections; Q weight/bias carry the 1/sqrt(D) scale
            q = jnp.dot(h, wqkv_ref[iq], preferred_element_type=jnp.float32) + bqkv_ref[iq]
            k = jnp.dot(h, wqkv_ref[ik], preferred_element_type=jnp.float32) + bqkv_ref[ik]
            v = jnp.dot(h, wqkv_ref[iv], preferred_element_type=jnp.float32) + bqkv_ref[iv]
            # whole-batch scores; cross-batch entries killed by attn_bias
            s = jax.lax.dot_general(q, k, (((1,), (1,)), ((), ())),
                                    preferred_element_type=jnp.float32)
            s = s + attn_bias
            s = s - jnp.max(s, axis=-1, keepdims=True)
            p = jnp.exp(s)
            p = p * pl.reciprocal(jnp.sum(p, axis=-1, keepdims=True), approx=True)
            ctx = jnp.dot(p, v, preferred_element_type=jnp.float32)        # (n_tok, D)
            # head-concat + output projection folded into an accumulated sum
            contrib = jnp.dot(ctx, wout_ref[li * NUM_HEADS + hh],
                              preferred_element_type=jnp.float32)          # (n_tok, H)
            attn = contrib if attn is None else attn + contrib
        attn = attn + lvec_ref[li * 6 + 0]                                  # bo
        h = _ln(h + attn, lvec_ref[li * 6 + 1], lvec_ref[li * 6 + 2])

        # feed-forward: GELU(h @ W1 + b1) @ W2 + b2, residual + LayerNorm
        f = jnp.dot(h, wffn_ref[li * 2 + 0], preferred_element_type=jnp.float32) + b1_ref[li]
        f = _gelu(f)
        # W2 stored transposed (H, I) -> contract over the last dims
        f = jax.lax.dot_general(f, wffn_ref[li * 2 + 1], (((1,), (1,)), ((), ())),
                                preferred_element_type=jnp.float32)
        f = f + lvec_ref[li * 6 + 3]                                        # b2
        h = _ln(h + f, lvec_ref[li * 6 + 4], lvec_ref[li * 6 + 5])

    # ---- CLS pooling via one-hot selection matmul (MXU, no sublane gather) --
    rows = jax.lax.broadcasted_iota(jnp.int32, (batch, n_tok), 0)
    cols = jax.lax.broadcasted_iota(jnp.int32, (batch, n_tok), 1)
    sel = (cols == rows * seq).astype(jnp.float32)                          # (B, n_tok)
    cls = jnp.dot(sel, h, preferred_element_type=jnp.float32)               # (B, H)

    # pre_classifier + ReLU (+ Dropout(0.5) == identity at inference)
    pre = jnp.dot(cls, wpre_ref[...], preferred_element_type=jnp.float32) + gvec_ref[2]
    pre = jnp.maximum(pre, 0.0)
    # TODO(synk): training-mode stochastic dropout (pltpu.prng_*) not implemented.
    logits = jnp.dot(pre, wcls_ref[...], preferred_element_type=jnp.float32) + bcls_ref[...]
    out_ref[...] = logits.astype(out_ref.dtype)                             # (B, 128) lane-dense


# ----------------------------- parameters -----------------------------------
def _dense_init(key, fan_in, fan_out):
    kw, kb = jax.random.split(key)
    w = jax.random.normal(kw, (fan_in, fan_out), jnp.float32) * 0.02
    b = jax.random.normal(kb, (fan_out,), jnp.float32) * 0.02
    return w, b


def init_params(key):
    keys = jax.random.split(key, 8 + NUM_LAYERS)
    p = {}
    p["word_emb"] = jax.random.normal(keys[0], (VOCAB_SIZE, HIDDEN), jnp.float32) * 0.02
    p["pos_emb"] = jax.random.normal(keys[1], (MAX_POS, HIDDEN), jnp.float32) * 0.02
    p["type_emb"] = jax.random.normal(keys[2], (TYPE_VOCAB_SIZE, HIDDEN), jnp.float32) * 0.02
    p["emb_ln_g"] = jnp.ones((HIDDEN,), jnp.float32)
    p["emb_ln_b"] = jnp.zeros((HIDDEN,), jnp.float32)

    layers = []
    for li in range(NUM_LAYERS):
        lk = jax.random.split(keys[3 + li], 6)
        layer = {}
        layer["wq"], layer["bq"] = _dense_init(lk[0], HIDDEN, HIDDEN)
        layer["wk"], layer["bk"] = _dense_init(lk[1], HIDDEN, HIDDEN)
        layer["wv"], layer["bv"] = _dense_init(lk[2], HIDDEN, HIDDEN)
        layer["wo"], layer["bo"] = _dense_init(lk[3], HIDDEN, HIDDEN)
        layer["attn_ln_g"] = jnp.ones((HIDDEN,), jnp.float32)
        layer["attn_ln_b"] = jnp.zeros((HIDDEN,), jnp.float32)
        layer["w1"], layer["b1"] = _dense_init(lk[4], HIDDEN, INTERMEDIATE)
        layer["w2"], layer["b2"] = _dense_init(lk[5], INTERMEDIATE, HIDDEN)
        layer["ffn_ln_g"] = jnp.ones((HIDDEN,), jnp.float32)
        layer["ffn_ln_b"] = jnp.zeros((HIDDEN,), jnp.float32)
        layers.append(layer)
    p["layers"] = layers

    p["pre_w"], p["pre_b"] = _dense_init(keys[3 + NUM_LAYERS], HIDDEN, HIDDEN)
    p["cls_w"], p["cls_b"] = _dense_init(keys[4 + NUM_LAYERS], HIDDEN, NUM_LABELS)
    return p


def pack_params(p):
    """Pack per-layer weights into a handful of stacked VMEM slabs."""
    ls = p["layers"]
    scale = 1.0 / math.sqrt(HEAD_DIM)

    wqkv_rows, bqkv_rows = [], []
    for l in ls:
        for (w, b, sc) in ((l["wq"], l["bq"], scale),   # fold attn scale into Q
                           (l["wk"], l["bk"], 1.0),
                           (l["wv"], l["bv"], 1.0)):
            for hh in range(NUM_HEADS):
                c0 = hh * HEAD_DIM
                wqkv_rows.append(w[:, c0:c0 + HEAD_DIM] * sc)                 # (H, D)
                bqkv_rows.append((b[c0:c0 + HEAD_DIM] * sc).reshape(1, HEAD_DIM))

    wout_rows = []
    for l in ls:
        for hh in range(NUM_HEADS):
            c0 = hh * HEAD_DIM
            wout_rows.append(l["wo"][c0:c0 + HEAD_DIM, :])                    # (D, H)

    wffn_rows, b1_rows, lvec_rows = [], [], []
    for l in ls:
        wffn_rows.append(l["w1"])                                             # (H, I)
        wffn_rows.append(l["w2"].T)                                           # (H, I)
        b1_rows.append(l["b1"].reshape(1, INTERMEDIATE))
        for v in (l["bo"], l["attn_ln_g"], l["attn_ln_b"],
                  l["b2"], l["ffn_ln_g"], l["ffn_ln_b"]):
            lvec_rows.append(v.reshape(1, HIDDEN))

    gvec_rows = [p["emb_ln_g"].reshape(1, HIDDEN),
                 p["emb_ln_b"].reshape(1, HIDDEN),
                 p["pre_b"].reshape(1, HIDDEN)]

    w_cls = jnp.zeros((HIDDEN, LOGITS_PAD), jnp.float32).at[:, :NUM_LABELS].set(p["cls_w"])
    b_cls = jnp.zeros((1, LOGITS_PAD), jnp.float32).at[0, :NUM_LABELS].set(p["cls_b"])

    return {
        "word_emb": p["word_emb"],
        "pos_emb": p["pos_emb"],
        "type_emb": p["type_emb"],
        "w_qkv": jnp.stack(wqkv_rows),      # (L*3*nH, H, D)
        "b_qkv": jnp.stack(bqkv_rows),      # (L*3*nH, 1, D)
        "w_out": jnp.stack(wout_rows),      # (L*nH, D, H)
        "w_ffn": jnp.stack(wffn_rows),      # (L*2, H, I)
        "b1": jnp.stack(b1_rows),           # (L, 1, I)
        "lvecs": jnp.stack(lvec_rows),      # (L*6, 1, H)
        "gvecs": jnp.stack(gvec_rows),      # (3, 1, H)
        "w_pre": p["pre_w"],                # (H, H)
        "w_cls": w_cls,                     # (H, 128)
        "b_cls": b_cls,                     # (1, 128)
    }


# ----------------------------- forward pass ---------------------------------
def bert_classifier_forward(packed, input_id, mask):
    B, S = input_id.shape
    n_tok = B * S
    ids = input_id.reshape(n_tok, 1).astype(jnp.int32)

    # block-diagonal (same batch element) AND key-not-padding additive bias
    maskf = mask.astype(jnp.float32).reshape(n_tok)
    batch_ids = jnp.repeat(jnp.arange(B, dtype=jnp.int32), S)
    same_batch = batch_ids[:, None] == batch_ids[None, :]
    allowed = jnp.logical_and(same_batch, maskf[None, :] > 0.5)
    attn_bias = jnp.where(allowed, 0.0, -10000.0).astype(jnp.float32)        # (n_tok, n_tok)

    # pre-tiled position + token-type (all zeros) embedding slab, (n_tok, H)
    pos_type = jnp.tile(packed["pos_emb"][:S] + packed["type_emb"][0][None, :], (B, 1))

    operands = (ids, attn_bias, packed["word_emb"], pos_type,
                packed["w_qkv"], packed["b_qkv"], packed["w_out"],
                packed["w_ffn"], packed["b1"], packed["lvecs"], packed["gvecs"],
                packed["w_pre"], packed["w_cls"], packed["b_cls"])

    kernel = functools.partial(_bert_fused_kernel, batch=B, seq=S)
    logits_pad = pl.pallas_call(
        kernel,
        out_shape=jax.ShapeDtypeStruct((B, LOGITS_PAD), jnp.float32),
        in_specs=[pl.BlockSpec(memory_space=pltpu.MemorySpace.VMEM)] * len(operands),
        out_specs=pl.BlockSpec(memory_space=pltpu.MemorySpace.VMEM),
    )(*operands)
    return logits_pad[:, :NUM_LABELS]


# ----------------------------- main ------------------------------------------
if __name__ == "__main__":
    key = jax.random.PRNGKey(0)
    kp, kid = jax.random.split(key)

    params = init_params(kp)
    packed = pack_params(params)

    input_id = jax.random.randint(kid, (BATCH, SEQ), 0, VOCAB_SIZE, dtype=jnp.int32)
    lengths = jnp.array([[SEQ], [SEQ - 2]], dtype=jnp.int32)
    mask = (jnp.arange(SEQ)[None, :] < lengths).astype(jnp.float32)          # (B, S)

    forward = jax.jit(bert_classifier_forward)
    logits = forward(packed, input_id, mask)
    jax.block_until_ready(logits)
    assert logits.shape == (BATCH, NUM_LABELS)
    print("KERNEL_OK")
</pallas_src>

<mosaic_0001>
module attributes {stable_mosaic.version = 11 : i64} {
  func.func @_bert_fused_kernel(%arg0: memref<16x1xi32, #tpu.memory_space<vmem>>, %arg1: memref<16x16xf32, #tpu.memory_space<vmem>>, %arg2: memref<128x32xf32, #tpu.memory_space<vmem>>, %arg3: memref<16x32xf32, #tpu.memory_space<vmem>>, %arg4: memref<12x32x16xf32, #tpu.memory_space<vmem>>, %arg5: memref<12x1x16xf32, #tpu.memory_space<vmem>>, %arg6: memref<4x16x32xf32, #tpu.memory_space<vmem>>, %arg7: memref<4x32x64xf32, #tpu.memory_space<vmem>>, %arg8: memref<2x1x64xf32, #tpu.memory_space<vmem>>, %arg9: memref<12x1x32xf32, #tpu.memory_space<vmem>>, %arg10: memref<3x1x32xf32, #tpu.memory_space<vmem>>, %arg11: memref<32x32xf32, #tpu.memory_space<vmem>>, %arg12: memref<32x128xf32, #tpu.memory_space<vmem>>, %arg13: memref<1x128xf32, #tpu.memory_space<vmem>>, %arg14: memref<2x128xf32, #tpu.memory_space<vmem>>) attributes {dimension_semantics = [], scalar_prefetch = 0 : i64, scratch_operands = 0 : i64, tpu.core_type = #tpu.core_type<tc>} {
    %c0 = arith.constant 0 : index
    %c0_0 = arith.constant 0 : index
    %0 = vector.load %arg0[%c0, %c0_0] : memref<16x1xi32, #tpu.memory_space<vmem>>, vector<16x1xi32>
    %1 = tpu.iota {dimensions = array<i32: 1>} : vector<16x128xi32>
    %2 = vector.broadcast %0 : vector<16x1xi32> to vector<16x128xi32>
    %3 = arith.cmpi eq, %1, %2 : vector<16x128xi32>
    %4 = arith.extui %3 : vector<16x128xi1> to vector<16x128xi32>
    %5 = arith.sitofp %4 : vector<16x128xi32> to vector<16x128xf32>
    %c0_1 = arith.constant 0 : index
    %c0_2 = arith.constant 0 : index
    %6 = vector.load %arg2[%c0_1, %c0_2] : memref<128x32xf32, #tpu.memory_space<vmem>>, vector<128x32xf32>
    %cst = arith.constant dense<0.000000e+00> : vector<16x32xf32>
    %7 = tpu.matmul %5, %6, %cst {dimension_numbers = #tpu.dot_dimension_numbers<[1], [0], [0], [1], [0, 0, 1, 1], [], []>} : vector<16x128xf32>, vector<128x32xf32>, vector<16x32xf32> -> vector<16x32xf32>
    %c0_3 = arith.constant 0 : index
    %c0_4 = arith.constant 0 : index
    %8 = vector.load %arg3[%c0_3, %c0_4] : memref<16x32xf32, #tpu.memory_space<vmem>>, vector<16x32xf32>
    %9 = arith.addf %7, %8 : vector<16x32xf32>
    %c0_5 = arith.constant 0 : index
    %c0_6 = arith.constant 0 : index
    %c0_7 = arith.constant 0 : index
    %10 = vector.load %arg10[%c0_5, %c0_6, %c0_7] : memref<3x1x32xf32, #tpu.memory_space<vmem>>, vector<1x1x32xf32>
    %11 = vector.shape_cast %10 : vector<1x1x32xf32> to vector<1x32xf32>
    %c1 = arith.constant 1 : index
    %c0_8 = arith.constant 0 : index
    %c0_9 = arith.constant 0 : index
    %12 = vector.load %arg10[%c1, %c0_8, %c0_9] : memref<3x1x32xf32, #tpu.memory_space<vmem>>, vector<1x1x32xf32>
    %13 = vector.shape_cast %12 : vector<1x1x32xf32> to vector<1x32xf32>
    %cst_10 = arith.constant dense<0.000000e+00> : vector<16xf32>
    %14 = vector.multi_reduction <add>, %9, %cst_10 [1] : vector<16x32xf32> to vector<16xf32>
    %15 = vector.shape_cast %14 : vector<16xf32> to vector<16x1xf32>
    %cst_11 = arith.constant 3.200000e+01 : f32
    %16 = vector.broadcast %cst_11 : f32 to vector<16x1xf32>
    %17 = arith.divf %15, %16 : vector<16x1xf32>
    %18 = vector.broadcast %17 : vector<16x1xf32> to vector<16x32xf32>
    %19 = arith.subf %9, %18 : vector<16x32xf32>
    %20 = arith.mulf %19, %19 : vector<16x32xf32>
    %cst_12 = arith.constant dense<0.000000e+00> : vector<16xf32>
    %21 = vector.multi_reduction <add>, %20, %cst_12 [1] : vector<16x32xf32> to vector<16xf32>
    %22 = vector.shape_cast %21 : vector<16xf32> to vector<16x1xf32>
    %cst_13 = arith.constant 3.200000e+01 : f32
    %23 = vector.broadcast %cst_13 : f32 to vector<16x1xf32>
    %24 = arith.divf %22, %23 : vector<16x1xf32>
    %cst_14 = arith.constant 9.99999996E-13 : f32
    %25 = vector.broadcast %cst_14 : f32 to vector<16x1xf32>
    %26 = arith.addf %24, %25 : vector<16x1xf32>
    %27 = math.rsqrt %26 : vector<16x1xf32>
    %28 = vector.broadcast %27 : vector<16x1xf32> to vector<16x32xf32>
    %29 = arith.mulf %19, %28 : vector<16x32xf32>
    %30 = vector.broadcast %11 : vector<1x32xf32> to vector<16x32xf32>
    %31 = arith.mulf %29, %30 : vector<16x32xf32>
    %32 = vector.broadcast %13 : vector<1x32xf32> to vector<16x32xf32>
    %33 = arith.addf %31, %32 : vector<16x32xf32>
    %c0_15 = arith.constant 0 : index
    %c0_16 = arith.constant 0 : index
    %34 = vector.load %arg1[%c0_15, %c0_16] : memref<16x16xf32, #tpu.memory_space<vmem>>, vector<16x16xf32>
    %c0_17 = arith.constant 0 : index
    %c0_18 = arith.constant 0 : index
    %c0_19 = arith.constant 0 : index
    %35 = vector.load %arg4[%c0_17, %c0_18, %c0_19] : memref<12x32x16xf32, #tpu.memory_space<vmem>>, vector<1x32x16xf32>
    %36 = vector.shape_cast %35 : vector<1x32x16xf32> to vector<32x16xf32>
    %cst_20 = arith.constant dense<0.000000e+00> : vector<16x16xf32>
    %37 = tpu.matmul %33, %36, %cst_20 {dimension_numbers = #tpu.dot_dimension_numbers<[1], [0], [0], [1], [0, 0, 1, 1], [], []>} : vector<16x32xf32>, vector<32x16xf32>, vector<16x16xf32> -> vector<16x16xf32>
    %c0_21 = arith.constant 0 : index
    %c0_22 = arith.constant 0 : index
    %c0_23 = arith.constant 0 : index
    %38 = vector.load %arg5[%c0_21, %c0_22, %c0_23] : memref<12x1x16xf32, #tpu.memory_space<vmem>>, vector<1x1x16xf32>
    %39 = vector.shape_cast %38 : vector<1x1x16xf32> to vector<1x16xf32>
    %40 = vector.broadcast %39 : vector<1x16xf32> to vector<16x16xf32>
    %41 = arith.addf %37, %40 : vector<16x16xf32>
    %c2 = arith.constant 2 : index
    %c0_24 = arith.constant 0 : index
    %c0_25 = arith.constant 0 : index
    %42 = vector.load %arg4[%c2, %c0_24, %c0_25] : memref<12x32x16xf32, #tpu.memory_space<vmem>>, vector<1x32x16xf32>
    %43 = vector.shape_cast %42 : vector<1x32x16xf32> to vector<32x16xf32>
    %cst_26 = arith.constant dense<0.000000e+00> : vector<16x16xf32>
    %44 = tpu.matmul %33, %43, %cst_26 {dimension_numbers = #tpu.dot_dimension_numbers<[1], [0], [0], [1], [0, 0, 1, 1], [], []>} : vector<16x32xf32>, vector<32x16xf32>, vector<16x16xf32> -> vector<16x16xf32>
    %c2_27 = arith.constant 2 : index
    %c0_28 = arith.constant 0 : index
    %c0_29 = arith.constant 0 : index
    %45 = vector.load %arg5[%c2_27, %c0_28, %c0_29] : memref<12x1x16xf32, #tpu.memory_space<vmem>>, vector<1x1x16xf32>
    %46 = vector.shape_cast %45 : vector<1x1x16xf32> to vector<1x16xf32>
    %47 = vector.broadcast %46 : vector<1x16xf32> to vector<16x16xf32>
    %48 = arith.addf %44, %47 : vector<16x16xf32>
    %c4 = arith.constant 4 : index
    %c0_30 = arith.constant 0 : index
    %c0_31 = arith.constant 0 : index
    %49 = vector.load %arg4[%c4, %c0_30, %c0_31] : memref<12x32x16xf32, #tpu.memory_space<vmem>>, vector<1x32x16xf32>
    %50 = vector.shape_cast %49 : vector<1x32x16xf32> to vector<32x16xf32>
    %cst_32 = arith.constant dense<0.000000e+00> : vector<16x16xf32>
    %51 = tpu.matmul %33, %50, %cst_32 {dimension_numbers = #tpu.dot_dimension_numbers<[1], [0], [0], [1], [0, 0, 1, 1], [], []>} : vector<16x32xf32>, vector<32x16xf32>, vector<16x16xf32> -> vector<16x16xf32>
    %c4_33 = arith.constant 4 : index
    %c0_34 = arith.constant 0 : index
    %c0_35 = arith.constant 0 : index
    %52 = vector.load %arg5[%c4_33, %c0_34, %c0_35] : memref<12x1x16xf32, #tpu.memory_space<vmem>>, vector<1x1x16xf32>
    %53 = vector.shape_cast %52 : vector<1x1x16xf32> to vector<1x16xf32>
    %54 = vector.broadcast %53 : vector<1x16xf32> to vector<16x16xf32>
    %55 = arith.addf %51, %54 : vector<16x16xf32>
    %cst_36 = arith.constant dense<0.000000e+00> : vector<16x16xf32>
    %56 = tpu.matmul %41, %48, %cst_36 {dimension_numbers = #tpu.dot_dimension_numbers<[1], [1], [0], [0], [0, 0, 1, 0], [], []>} : vector<16x16xf32>, vector<16x16xf32>, vector<16x16xf32> -> vector<16x16xf32>
    %57 = arith.addf %56, %34 : vector<16x16xf32>
    %cst_37 = arith.constant dense<0xFF800000> : vector<16xf32>
    %58 = vector.multi_reduction <maximumf>, %57, %cst_37 [1] : vector<16x16xf32> to vector<16xf32>
    %59 = vector.shape_cast %58 : vector<16xf32> to vector<16x1xf32>
    %60 = vector.broadcast %59 : vector<16x1xf32> to vector<16x16xf32>
    %61 = arith.subf %57, %60 : vector<16x16xf32>
    %62 = math.exp %61 : vector<16x16xf32>
    %cst_38 = arith.constant dense<0.000000e+00> : vector<16xf32>
    %63 = vector.multi_reduction <add>, %62, %cst_38 [1] : vector<16x16xf32> to vector<16xf32>
    %64 = vector.shape_cast %63 : vector<16xf32> to vector<16x1xf32>
    %65 = tpu.reciprocal %64 {approx = true} : vector<16x1xf32> -> vector<16x1xf32>
    %66 = vector.broadcast %65 : vector<16x1xf32> to vector<16x16xf32>
    %67 = arith.mulf %62, %66 : vector<16x16xf32>
    %cst_39 = arith.constant dense<0.000000e+00> : vector<16x16xf32>
    %68 = tpu.matmul %67, %55, %cst_39 {dimension_numbers = #tpu.dot_dimension_numbers<[1], [0], [0], [1], [0, 0, 1, 1], [], []>} : vector<16x16xf32>, vector<16x16xf32>, vector<16x16xf32> -> vector<16x16xf32>
    %c0_40 = arith.constant 0 : index
    %c0_41 = arith.constant 0 : index
    %c0_42 = arith.constant 0 : index
    %69 = vector.load %arg6[%c0_40, %c0_41, %c0_42] : memref<4x16x32xf32, #tpu.memory_space<vmem>>, vector<1x16x32xf32>
    %70 = vector.shape_cast %69 : vector<1x16x32xf32> to vector<16x32xf32>
    %cst_43 = arith.constant dense<0.000000e+00> : vector<16x32xf32>
    %71 = tpu.matmul %68, %70, %cst_43 {dimension_numbers = #tpu.dot_dimension_numbers<[1], [0], [0], [1], [0, 0, 1, 1], [], []>} : vector<16x16xf32>, vector<16x32xf32>, vector<16x32xf32> -> vector<16x32xf32>
    %c1_44 = arith.constant 1 : index
    %c0_45 = arith.constant 0 : index
    %c0_46 = arith.constant 0 : index
    %72 = vector.load %arg4[%c1_44, %c0_45, %c0_46] : memref<12x32x16xf32, #tpu.memory_space<vmem>>, vector<1x32x16xf32>
    %73 = vector.shape_cast %72 : vector<1x32x16xf32> to vector<32x16xf32>
    %cst_47 = arith.constant dense<0.000000e+00> : vector<16x16xf32>
    %74 = tpu.matmul %33, %73, %cst_47 {dimension_numbers = #tpu.dot_dimension_numbers<[1], [0], [0], [1], [0, 0, 1, 1], [], []>} : vector<16x32xf32>, vector<32x16xf32>, vector<16x16xf32> -> vector<16x16xf32>
    %c1_48 = arith.constant 1 : index
    %c0_49 = arith.constant 0 : index
    %c0_50 = arith.constant 0 : index
    %75 = vector.load %arg5[%c1_48, %c0_49, %c0_50] : memref<12x1x16xf32, #tpu.memory_space<vmem>>, vector<1x1x16xf32>
    %76 = vector.shape_cast %75 : vector<1x1x16xf32> to vector<1x16xf32>
    %77 = vector.broadcast %76 : vector<1x16xf32> to vector<16x16xf32>
    %78 = arith.addf %74, %77 : vector<16x16xf32>
    %c3 = arith.constant 3 : index
    %c0_51 = arith.constant 0 : index
    %c0_52 = arith.constant 0 : index
    %79 = vector.load %arg4[%c3, %c0_51, %c0_52] : memref<12x32x16xf32, #tpu.memory_space<vmem>>, vector<1x32x16xf32>
    %80 = vector.shape_cast %79 : vector<1x32x16xf32> to vector<32x16xf32>
    %cst_53 = arith.constant dense<0.000000e+00> : vector<16x16xf32>
    %81 = tpu.matmul %33, %80, %cst_53 {dimension_numbers = #tpu.dot_dimension_numbers<[1], [0], [0], [1], [0, 0, 1, 1], [], []>} : vector<16x32xf32>, vector<32x16xf32>, vector<16x16xf32> -> vector<16x16xf32>
    %c3_54 = arith.constant 3 : index
    %c0_55 = arith.constant 0 : index
    %c0_56 = arith.constant 0 : index
    %82 = vector.load %arg5[%c3_54, %c0_55, %c0_56] : memref<12x1x16xf32, #tpu.memory_space<vmem>>, vector<1x1x16xf32>
    %83 = vector.shape_cast %82 : vector<1x1x16xf32> to vector<1x16xf32>
    %84 = vector.broadcast %83 : vector<1x16xf32> to vector<16x16xf32>
    %85 = arith.addf %81, %84 : vector<16x16xf32>
    %c5 = arith.constant 5 : index
    %c0_57 = arith.constant 0 : index
    %c0_58 = arith.constant 0 : index
    %86 = vector.load %arg4[%c5, %c0_57, %c0_58] : memref<12x32x16xf32, #tpu.memory_space<vmem>>, vector<1x32x16xf32>
    %87 = vector.shape_cast %86 : vector<1x32x16xf32> to vector<32x16xf32>
    %cst_59 = arith.constant dense<0.000000e+00> : vector<16x16xf32>
    %88 = tpu.matmul %33, %87, %cst_59 {dimension_numbers = #tpu.dot_dimension_numbers<[1], [0], [0], [1], [0, 0, 1, 1], [], []>} : vector<16x32xf32>, vector<32x16xf32>, vector<16x16xf32> -> vector<16x16xf32>
    %c5_60 = arith.constant 5 : index
    %c0_61 = arith.constant 0 : index
    %c0_62 = arith.constant 0 : index
    %89 = vector.load %arg5[%c5_60, %c0_61, %c0_62] : memref<12x1x16xf32, #tpu.memory_space<vmem>>, vector<1x1x16xf32>
    %90 = vector.shape_cast %89 : vector<1x1x16xf32> to vector<1x16xf32>
    %91 = vector.broadcast %90 : vector<1x16xf32> to vector<16x16xf32>
    %92 = arith.addf %88, %91 : vector<16x16xf32>
    %cst_63 = arith.constant dense<0.000000e+00> : vector<16x16xf32>
    %93 = tpu.matmul %78, %85, %cst_63 {dimension_numbers = #tpu.dot_dimension_numbers<[1], [1], [0], [0], [0, 0, 1, 0], [], []>} : vector<16x16xf32>, vector<16x16xf32>, vector<16x16xf32> -> vector<16x16xf32>
    %94 = arith.addf %93, %34 : vector<16x16xf32>
    %cst_64 = arith.constant dense<0xFF800000> : vector<16xf32>
    %95 = vector.multi_reduction <maximumf>, %94, %cst_64 [1] : vector<16x16xf32> to vector<16xf32>
    %96 = vector.shape_cast %95 : vector<16xf32> to vector<16x1xf32>
    %97 = vector.broadcast %96 : vector<16x1xf32> to vector<16x16xf32>
    %98 = arith.subf %94, %97 : vector<16x16xf32>
    %99 = math.exp %98 : vector<16x16xf32>
    %cst_65 = arith.constant dense<0.000000e+00> : vector<16xf32>
    %100 = vector.multi_reduction <add>, %99, %cst_65 [1] : vector<16x16xf32> to vector<16xf32>
    %101 = vector.shape_cast %100 : vector<16xf32> to vector<16x1xf32>
    %102 = tpu.reciprocal %101 {approx = true} : vector<16x1xf32> -> vector<16x1xf32>
    %103 = vector.broadcast %102 : vector<16x1xf32> to vector<16x16xf32>
    %104 = arith.mulf %99, %103 : vector<16x16xf32>
    %cst_66 = arith.constant dense<0.000000e+00> : vector<16x16xf32>
    %105 = tpu.matmul %104, %92, %cst_66 {dimension_numbers = #tpu.dot_dimension_numbers<[1], [0], [0], [1], [0, 0, 1, 1], [], []>} : vector<16x16xf32>, vector<16x16xf32>, vector<16x16xf32> -> vector<16x16xf32>
    %c1_67 = arith.constant 1 : index
    %c0_68 = arith.constant 0 : index
    %c0_69 = arith.constant 0 : index
    %106 = vector.load %arg6[%c1_67, %c0_68, %c0_69] : memref<4x16x32xf32, #tpu.memory_space<vmem>>, vector<1x16x32xf32>
    %107 = vector.shape_cast %106 : vector<1x16x32xf32> to vector<16x32xf32>
    %cst_70 = arith.constant dense<0.000000e+00> : vector<16x32xf32>
    %108 = tpu.matmul %105, %107, %cst_70 {dimension_numbers = #tpu.dot_dimension_numbers<[1], [0], [0], [1], [0, 0, 1, 1], [], []>} : vector<16x16xf32>, vector<16x32xf32>, vector<16x32xf32> -> vector<16x32xf32>
    %109 = arith.addf %71, %108 : vector<16x32xf32>
    %c0_71 = arith.constant 0 : index
    %c0_72 = arith.constant 0 : index
    %c0_73 = arith.constant 0 : index
    %110 = vector.load %arg9[%c0_71, %c0_72, %c0_73] : memref<12x1x32xf32, #tpu.memory_space<vmem>>, vector<1x1x32xf32>
    %111 = vector.shape_cast %110 : vector<1x1x32xf32> to vector<1x32xf32>
    %112 = vector.broadcast %111 : vector<1x32xf32> to vector<16x32xf32>
    %113 = arith.addf %109, %112 : vector<16x32xf32>
    %114 = arith.addf %33, %113 : vector<16x32xf32>
    %c1_74 = arith.constant 1 : index
    %c0_75 = arith.constant 0 : index
    %c0_76 = arith.constant 0 : index
    %115 = vector.load %arg9[%c1_74, %c0_75, %c0_76] : memref<12x1x32xf32, #tpu.memory_space<vmem>>, vector<1x1x32xf32>
    %116 = vector.shape_cast %115 : vector<1x1x32xf32> to vector<1x32xf32>
    %c2_77 = arith.constant 2 : index
    %c0_78 = arith.constant 0 : index
    %c0_79 = arith.constant 0 : index
    %117 = vector.load %arg9[%c2_77, %c0_78, %c0_79] : memref<12x1x32xf32, #tpu.memory_space<vmem>>, vector<1x1x32xf32>
    %118 = vector.shape_cast %117 : vector<1x1x32xf32> to vector<1x32xf32>
    %cst_80 = arith.constant dense<0.000000e+00> : vector<16xf32>
    %119 = vector.multi_reduction <add>, %114, %cst_80 [1] : vector<16x32xf32> to vector<16xf32>
    %120 = vector.shape_cast %119 : vector<16xf32> to vector<16x1xf32>
    %cst_81 = arith.constant 3.200000e+01 : f32
    %121 = vector.broadcast %cst_81 : f32 to vector<16x1xf32>
    %122 = arith.divf %120, %121 : vector<16x1xf32>
    %123 = vector.broadcast %122 : vector<16x1xf32> to vector<16x32xf32>
    %124 = arith.subf %114, %123 : vector<16x32xf32>
    %125 = arith.mulf %124, %124 : vector<16x32xf32>
    %cst_82 = arith.constant dense<0.000000e+00> : vector<16xf32>
    %126 = vector.multi_reduction <add>, %125, %cst_82 [1] : vector<16x32xf32> to vector<16xf32>
    %127 = vector.shape_cast %126 : vector<16xf32> to vector<16x1xf32>
    %cst_83 = arith.constant 3.200000e+01 : f32
    %128 = vector.broadcast %cst_83 : f32 to vector<16x1xf32>
    %129 = arith.divf %127, %128 : vector<16x1xf32>
    %cst_84 = arith.constant 9.99999996E-13 : f32
    %130 = vector.broadcast %cst_84 : f32 to vector<16x1xf32>
    %131 = arith.addf %129, %130 : vector<16x1xf32>
    %132 = math.rsqrt %131 : vector<16x1xf32>
    %133 = vector.broadcast %132 : vector<16x1xf32> to vector<16x32xf32>
    %134 = arith.mulf %124, %133 : vector<16x32xf32>
    %135 = vector.broadcast %116 : vector<1x32xf32> to vector<16x32xf32>
    %136 = arith.mulf %134, %135 : vector<16x32xf32>
    %137 = vector.broadcast %118 : vector<1x32xf32> to vector<16x32xf32>
    %138 = arith.addf %136, %137 : vector<16x32xf32>
    %c0_85 = arith.constant 0 : index
    %c0_86 = arith.constant 0 : index
    %c0_87 = arith.constant 0 : index
    %139 = vector.load %arg7[%c0_85, %c0_86, %c0_87] : memref<4x32x64xf32, #tpu.memory_space<vmem>>, vector<1x32x64xf32>
    %140 = vector.shape_cast %139 : vector<1x32x64xf32> to vector<32x64xf32>
    %cst_88 = arith.constant dense<0.000000e+00> : vector<16x64xf32>
    %141 = tpu.matmul %138, %140, %cst_88 {dimension_numbers = #tpu.dot_dimension_numbers<[1], [0], [0], [1], [0, 0, 1, 1], [], []>} : vector<16x32xf32>, vector<32x64xf32>, vector<16x64xf32> -> vector<16x64xf32>
    %c0_89 = arith.constant 0 : index
    %c0_90 = arith.constant 0 : index
    %c0_91 = arith.constant 0 : index
    %142 = vector.load %arg8[%c0_89, %c0_90, %c0_91] : memref<2x1x64xf32, #tpu.memory_space<vmem>>, vector<1x1x64xf32>
    %143 = vector.shape_cast %142 : vector<1x1x64xf32> to vector<1x64xf32>
    %144 = vector.broadcast %143 : vector<1x64xf32> to vector<16x64xf32>
    %145 = arith.addf %141, %144 : vector<16x64xf32>
    %cst_92 = arith.constant 5.000000e-01 : f32
    %146 = vector.broadcast %cst_92 : f32 to vector<16x64xf32>
    %147 = arith.mulf %146, %145 : vector<16x64xf32>
    %cst_93 = arith.constant 4.471500e-02 : f32
    %148 = vector.broadcast %cst_93 : f32 to vector<16x64xf32>
    %149 = arith.mulf %148, %145 : vector<16x64xf32>
    %150 = arith.mulf %149, %145 : vector<16x64xf32>
    %151 = arith.mulf %150, %145 : vector<16x64xf32>
    %152 = arith.addf %145, %151 : vector<16x64xf32>
    %cst_94 = arith.constant 0.797884583 : f32
    %153 = vector.broadcast %cst_94 : f32 to vector<16x64xf32>
    %154 = arith.mulf %153, %152 : vector<16x64xf32>
    %155 = math.tanh %154 : vector<16x64xf32>
    %cst_95 = arith.constant 1.000000e+00 : f32
    %156 = vector.broadcast %cst_95 : f32 to vector<16x64xf32>
    %157 = arith.addf %156, %155 : vector<16x64xf32>
    %158 = arith.mulf %147, %157 : vector<16x64xf32>
    %c1_96 = arith.constant 1 : index
    %c0_97 = arith.constant 0 : index
    %c0_98 = arith.constant 0 : index
    %159 = vector.load %arg7[%c1_96, %c0_97, %c0_98] : memref<4x32x64xf32, #tpu.memory_space<vmem>>, vector<1x32x64xf32>
    %160 = vector.shape_cast %159 : vector<1x32x64xf32> to vector<32x64xf32>
    %cst_99 = arith.constant dense<0.000000e+00> : vector<16x32xf32>
    %161 = tpu.matmul %158, %160, %cst_99 {dimension_numbers = #tpu.dot_dimension_numbers<[1], [1], [0], [0], [0, 0, 1, 0], [], []>} : vector<16x64xf32>, vector<32x64xf32>, vector<16x32xf32> -> vector<16x32xf32>
    %c3_100 = arith.constant 3 : index
    %c0_101 = arith.constant 0 : index
    %c0_102 = arith.constant 0 : index
    %162 = vector.load %arg9[%c3_100, %c0_101, %c0_102] : memref<12x1x32xf32, #tpu.memory_space<vmem>>, vector<1x1x32xf32>
    %163 = vector.shape_cast %162 : vector<1x1x32xf32> to vector<1x32xf32>
    %164 = vector.broadcast %163 : vector<1x32xf32> to vector<16x32xf32>
    %165 = arith.addf %161, %164 : vector<16x32xf32>
    %166 = arith.addf %138, %165 : vector<16x32xf32>
    %c4_103 = arith.constant 4 : index
    %c0_104 = arith.constant 0 : index
    %c0_105 = arith.constant 0 : index
    %167 = vector.load %arg9[%c4_103, %c0_104, %c0_105] : memref<12x1x32xf32, #tpu.memory_space<vmem>>, vector<1x1x32xf32>
    %168 = vector.shape_cast %167 : vector<1x1x32xf32> to vector<1x32xf32>
    %c5_106 = arith.constant 5 : index
    %c0_107 = arith.constant 0 : index
    %c0_108 = arith.constant 0 : index
    %169 = vector.load %arg9[%c5_106, %c0_107, %c0_108] : memref<12x1x32xf32, #tpu.memory_space<vmem>>, vector<1x1x32xf32>
    %170 = vector.shape_cast %169 : vector<1x1x32xf32> to vector<1x32xf32>
    %cst_109 = arith.constant dense<0.000000e+00> : vector<16xf32>
    %171 = vector.multi_reduction <add>, %166, %cst_109 [1] : vector<16x32xf32> to vector<16xf32>
    %172 = vector.shape_cast %171 : vector<16xf32> to vector<16x1xf32>
    %cst_110 = arith.constant 3.200000e+01 : f32
    %173 = vector.broadcast %cst_110 : f32 to vector<16x1xf32>
    %174 = arith.divf %172, %173 : vector<16x1xf32>
    %175 = vector.broadcast %174 : vector<16x1xf32> to vector<16x32xf32>
    %176 = arith.subf %166, %175 : vector<16x32xf32>
    %177 = arith.mulf %176, %176 : vector<16x32xf32>
    %cst_111 = arith.constant dense<0.000000e+00> : vector<16xf32>
    %178 = vector.multi_reduction <add>, %177, %cst_111 [1] : vector<16x32xf32> to vector<16xf32>
    %179 = vector.shape_cast %178 : vector<16xf32> to vector<16x1xf32>
    %cst_112 = arith.constant 3.200000e+01 : f32
    %180 = vector.broadcast %cst_112 : f32 to vector<16x1xf32>
    %181 = arith.divf %179, %180 : vector<16x1xf32>
    %cst_113 = arith.constant 9.99999996E-13 : f32
    %182 = vector.broadcast %cst_113 : f32 to vector<16x1xf32>
    %183 = arith.addf %181, %182 : vector<16x1xf32>
    %184 = math.rsqrt %183 : vector<16x1xf32>
    %185 = vector.broadcast %184 : vector<16x1xf32> to vector<16x32xf32>
    %186 = arith.mulf %176, %185 : vector<16x32xf32>
    %187 = vector.broadcast %168 : vector<1x32xf32> to vector<16x32xf32>
    %188 = arith.mulf %186, %187 : vector<16x32xf32>
    %189 = vector.broadcast %170 : vector<1x32xf32> to vector<16x32xf32>
    %190 = arith.addf %188, %189 : vector<16x32xf32>
    %c6 = arith.constant 6 : index
    %c0_114 = arith.constant 0 : index
    %c0_115 = arith.constant 0 : index
    %191 = vector.load %arg4[%c6, %c0_114, %c0_115] : memref<12x32x16xf32, #tpu.memory_space<vmem>>, vector<1x32x16xf32>
    %192 = vector.shape_cast %191 : vector<1x32x16xf32> to vector<32x16xf32>
    %cst_116 = arith.constant dense<0.000000e+00> : vector<16x16xf32>
    %193 = tpu.matmul %190, %192, %cst_116 {dimension_numbers = #tpu.dot_dimension_numbers<[1], [0], [0], [1], [0, 0, 1, 1], [], []>} : vector<16x32xf32>, vector<32x16xf32>, vector<16x16xf32> -> vector<16x16xf32>
    %c6_117 = arith.constant 6 : index
    %c0_118 = arith.constant 0 : index
    %c0_119 = arith.constant 0 : index
    %194 = vector.load %arg5[%c6_117, %c0_118, %c0_119] : memref<12x1x16xf32, #tpu.memory_space<vmem>>, vector<1x1x16xf32>
    %195 = vector.shape_cast %194 : vector<1x1x16xf32> to vector<1x16xf32>
    %196 = vector.broadcast %195 : vector<1x16xf32> to vector<16x16xf32>
    %197 = arith.addf %193, %196 : vector<16x16xf32>
    %c8 = arith.constant 8 : index
    %c0_120 = arith.constant 0 : index
    %c0_121 = arith.constant 0 : index
    %198 = vector.load %arg4[%c8, %c0_120, %c0_121] : memref<12x32x16xf32, #tpu.memory_space<vmem>>, vector<1x32x16xf32>
    %199 = vector.shape_cast %198 : vector<1x32x16xf32> to vector<32x16xf32>
    %cst_122 = arith.constant dense<0.000000e+00> : vector<16x16xf32>
    %200 = tpu.matmul %190, %199, %cst_122 {dimension_numbers = #tpu.dot_dimension_numbers<[1], [0], [0], [1], [0, 0, 1, 1], [], []>} : vector<16x32xf32>, vector<32x16xf32>, vector<16x16xf32> -> vector<16x16xf32>
    %c8_123 = arith.constant 8 : index
    %c0_124 = arith.constant 0 : index
    %c0_125 = arith.constant 0 : index
    %201 = vector.load %arg5[%c8_123, %c0_124, %c0_125] : memref<12x1x16xf32, #tpu.memory_space<vmem>>, vector<1x1x16xf32>
    %202 = vector.shape_cast %201 : vector<1x1x16xf32> to vector<1x16xf32>
    %203 = vector.broadcast %202 : vector<1x16xf32> to vector<16x16xf32>
    %204 = arith.addf %200, %203 : vector<16x16xf32>
    %c10 = arith.constant 10 : index
    %c0_126 = arith.constant 0 : index
    %c0_127 = arith.constant 0 : index
    %205 = vector.load %arg4[%c10, %c0_126, %c0_127] : memref<12x32x16xf32, #tpu.memory_space<vmem>>, vector<1x32x16xf32>
    %206 = vector.shape_cast %205 : vector<1x32x16xf32> to vector<32x16xf32>
    %cst_128 = arith.constant dense<0.000000e+00> : vector<16x16xf32>
    %207 = tpu.matmul %190, %206, %cst_128 {dimension_numbers = #tpu.dot_dimension_numbers<[1], [0], [0], [1], [0, 0, 1, 1], [], []>} : vector<16x32xf32>, vector<32x16xf32>, vector<16x16xf32> -> vector<16x16xf32>
    %c10_129 = arith.constant 10 : index
    %c0_130 = arith.constant 0 : index
    %c0_131 = arith.constant 0 : index
    %208 = vector.load %arg5[%c10_129, %c0_130, %c0_131] : memref<12x1x16xf32, #tpu.memory_space<vmem>>, vector<1x1x16xf32>
    %209 = vector.shape_cast %208 : vector<1x1x16xf32> to vector<1x16xf32>
    %210 = vector.broadcast %209 : vector<1x16xf32> to vector<16x16xf32>
    %211 = arith.addf %207, %210 : vector<16x16xf32>
    %cst_132 = arith.constant dense<0.000000e+00> : vector<16x16xf32>
    %212 = tpu.matmul %197, %204, %cst_132 {dimension_numbers = #tpu.dot_dimension_numbers<[1], [1], [0], [0], [0, 0, 1, 0], [], []>} : vector<16x16xf32>, vector<16x16xf32>, vector<16x16xf32> -> vector<16x16xf32>
    %213 = arith.addf %212, %34 : vector<16x16xf32>
    %cst_133 = arith.constant dense<0xFF800000> : vector<16xf32>
    %214 = vector.multi_reduction <maximumf>, %213, %cst_133 [1] : vector<16x16xf32> to vector<16xf32>
    %215 = vector.shape_cast %214 : vector<16xf32> to vector<16x1xf32>
    %216 = vector.broadcast %215 : vector<16x1xf32> to vector<16x16xf32>
    %217 = arith.subf %213, %216 : vector<16x16xf32>
    %218 = math.exp %217 : vector<16x16xf32>
    %cst_134 = arith.constant dense<0.000000e+00> : vector<16xf32>
    %219 = vector.multi_reduction <add>, %218, %cst_134 [1] : vector<16x16xf32> to vector<16xf32>
    %220 = vector.shape_cast %219 : vector<16xf32> to vector<16x1xf32>
    %221 = tpu.reciprocal %220 {approx = true} : vector<16x1xf32> -> vector<16x1xf32>
    %222 = vector.broadcast %221 : vector<16x1xf32> to vector<16x16xf32>
    %223 = arith.mulf %218, %222 : vector<16x16xf32>
    %cst_135 = arith.constant dense<0.000000e+00> : vector<16x16xf32>
    %224 = tpu.matmul %223, %211, %cst_135 {dimension_numbers = #tpu.dot_dimension_numbers<[1], [0], [0], [1], [0, 0, 1, 1], [], []>} : vector<16x16xf32>, vector<16x16xf32>, vector<16x16xf32> -> vector<16x16xf32>
    %c2_136 = arith.constant 2 : index
    %c0_137 = arith.constant 0 : index
    %c0_138 = arith.constant 0 : index
    %225 = vector.load %arg6[%c2_136, %c0_137, %c0_138] : memref<4x16x32xf32, #tpu.memory_space<vmem>>, vector<1x16x32xf32>
    %226 = vector.shape_cast %225 : vector<1x16x32xf32> to vector<16x32xf32>
    %cst_139 = arith.constant dense<0.000000e+00> : vector<16x32xf32>
    %227 = tpu.matmul %224, %226, %cst_139 {dimension_numbers = #tpu.dot_dimension_numbers<[1], [0], [0], [1], [0, 0, 1, 1], [], []>} : vector<16x16xf32>, vector<16x32xf32>, vector<16x32xf32> -> vector<16x32xf32>
    %c7 = arith.constant 7 : index
    %c0_140 = arith.constant 0 : index
    %c0_141 = arith.constant 0 : index
    %228 = vector.load %arg4[%c7, %c0_140, %c0_141] : memref<12x32x16xf32, #tpu.memory_space<vmem>>, vector<1x32x16xf32>
    %229 = vector.shape_cast %228 : vector<1x32x16xf32> to vector<32x16xf32>
    %cst_142 = arith.constant dense<0.000000e+00> : vector<16x16xf32>
    %230 = tpu.matmul %190, %229, %cst_142 {dimension_numbers = #tpu.dot_dimension_numbers<[1], [0], [0], [1], [0, 0, 1, 1], [], []>} : vector<16x32xf32>, vector<32x16xf32>, vector<16x16xf32> -> vector<16x16xf32>
    %c7_143 = arith.constant 7 : index
    %c0_144 = arith.constant 0 : index
    %c0_145 = arith.constant 0 : index
    %231 = vector.load %arg5[%c7_143, %c0_144, %c0_145] : memref<12x1x16xf32, #tpu.memory_space<vmem>>, vector<1x1x16xf32>
    %232 = vector.shape_cast %231 : vector<1x1x16xf32> to vector<1x16xf32>
    %233 = vector.broadcast %232 : vector<1x16xf32> to vector<16x16xf32>
    %234 = arith.addf %230, %233 : vector<16x16xf32>
    %c9 = arith.constant 9 : index
    %c0_146 = arith.constant 0 : index
    %c0_147 = arith.constant 0 : index
    %235 = vector.load %arg4[%c9, %c0_146, %c0_147] : memref<12x32x16xf32, #tpu.memory_space<vmem>>, vector<1x32x16xf32>
    %236 = vector.shape_cast %235 : vector<1x32x16xf32> to vector<32x16xf32>
    %cst_148 = arith.constant dense<0.000000e+00> : vector<16x16xf32>
    %237 = tpu.matmul %190, %236, %cst_148 {dimension_numbers = #tpu.dot_dimension_numbers<[1], [0], [0], [1], [0, 0, 1, 1], [], []>} : vector<16x32xf32>, vector<32x16xf32>, vector<16x16xf32> -> vector<16x16xf32>
    %c9_149 = arith.constant 9 : index
    %c0_150 = arith.constant 0 : index
    %c0_151 = arith.constant 0 : index
    %238 = vector.load %arg5[%c9_149, %c0_150, %c0_151] : memref<12x1x16xf32, #tpu.memory_space<vmem>>, vector<1x1x16xf32>
    %239 = vector.shape_cast %238 : vector<1x1x16xf32> to vector<1x16xf32>
    %240 = vector.broadcast %239 : vector<1x16xf32> to vector<16x16xf32>
    %241 = arith.addf %237, %240 : vector<16x16xf32>
    %c11 = arith.constant 11 : index
    %c0_152 = arith.constant 0 : index
    %c0_153 = arith.constant 0 : index
    %242 = vector.load %arg4[%c11, %c0_152, %c0_153] : memref<12x32x16xf32, #tpu.memory_space<vmem>>, vector<1x32x16xf32>
    %243 = vector.shape_cast %242 : vector<1x32x16xf32> to vector<32x16xf32>
    %cst_154 = arith.constant dense<0.000000e+00> : vector<16x16xf32>
    %244 = tpu.matmul %190, %243, %cst_154 {dimension_numbers = #tpu.dot_dimension_numbers<[1], [0], [0], [1], [0, 0, 1, 1], [], []>} : vector<16x32xf32>, vector<32x16xf32>, vector<16x16xf32> -> vector<16x16xf32>
    %c11_155 = arith.constant 11 : index
    %c0_156 = arith.constant 0 : index
    %c0_157 = arith.constant 0 : index
    %245 = vector.load %arg5[%c11_155, %c0_156, %c0_157] : memref<12x1x16xf32, #tpu.memory_space<vmem>>, vector<1x1x16xf32>
    %246 = vector.shape_cast %245 : vector<1x1x16xf32> to vector<1x16xf32>
    %247 = vector.broadcast %246 : vector<1x16xf32> to vector<16x16xf32>
    %248 = arith.addf %244, %247 : vector<16x16xf32>
    %cst_158 = arith.constant dense<0.000000e+00> : vector<16x16xf32>
    %249 = tpu.matmul %234, %241, %cst_158 {dimension_numbers = #tpu.dot_dimension_numbers<[1], [1], [0], [0], [0, 0, 1, 0], [], []>} : vector<16x16xf32>, vector<16x16xf32>, vector<16x16xf32> -> vector<16x16xf32>
    %250 = arith.addf %249, %34 : vector<16x16xf32>
    %cst_159 = arith.constant dense<0xFF800000> : vector<16xf32>
    %251 = vector.multi_reduction <maximumf>, %250, %cst_159 [1] : vector<16x16xf32> to vector<16xf32>
    %252 = vector.shape_cast %251 : vector<16xf32> to vector<16x1xf32>
    %253 = vector.broadcast %252 : vector<16x1xf32> to vector<16x16xf32>
    %254 = arith.subf %250, %253 : vector<16x16xf32>
    %255 = math.exp %254 : vector<16x16xf32>
    %cst_160 = arith.constant dense<0.000000e+00> : vector<16xf32>
    %256 = vector.multi_reduction <add>, %255, %cst_160 [1] : vector<16x16xf32> to vector<16xf32>
    %257 = vector.shape_cast %256 : vector<16xf32> to vector<16x1xf32>
    %258 = tpu.reciprocal %257 {approx = true} : vector<16x1xf32> -> vector<16x1xf32>
    %259 = vector.broadcast %258 : vector<16x1xf32> to vector<16x16xf32>
    %260 = arith.mulf %255, %259 : vector<16x16xf32>
    %cst_161 = arith.constant dense<0.000000e+00> : vector<16x16xf32>
    %261 = tpu.matmul %260, %248, %cst_161 {dimension_numbers = #tpu.dot_dimension_numbers<[1], [0], [0], [1], [0, 0, 1, 1], [], []>} : vector<16x16xf32>, vector<16x16xf32>, vector<16x16xf32> -> vector<16x16xf32>
    %c3_162 = arith.constant 3 : index
    %c0_163 = arith.constant 0 : index
    %c0_164 = arith.constant 0 : index
    %262 = vector.load %arg6[%c3_162, %c0_163, %c0_164] : memref<4x16x32xf32, #tpu.memory_space<vmem>>, vector<1x16x32xf32>
    %263 = vector.shape_cast %262 : vector<1x16x32xf32> to vector<16x32xf32>
    %cst_165 = arith.constant dense<0.000000e+00> : vector<16x32xf32>
    %264 = tpu.matmul %261, %263, %cst_165 {dimension_numbers = #tpu.dot_dimension_numbers<[1], [0], [0], [1], [0, 0, 1, 1], [], []>} : vector<16x16xf32>, vector<16x32xf32>, vector<16x32xf32> -> vector<16x32xf32>
    %265 = arith.addf %227, %264 : vector<16x32xf32>
    %c6_166 = arith.constant 6 : index
    %c0_167 = arith.constant 0 : index
    %c0_168 = arith.constant 0 : index
    %266 = vector.load %arg9[%c6_166, %c0_167, %c0_168] : memref<12x1x32xf32, #tpu.memory_space<vmem>>, vector<1x1x32xf32>
    %267 = vector.shape_cast %266 : vector<1x1x32xf32> to vector<1x32xf32>
    %268 = vector.broadcast %267 : vector<1x32xf32> to vector<16x32xf32>
    %269 = arith.addf %265, %268 : vector<16x32xf32>
    %270 = arith.addf %190, %269 : vector<16x32xf32>
    %c7_169 = arith.constant 7 : index
    %c0_170 = arith.constant 0 : index
    %c0_171 = arith.constant 0 : index
    %271 = vector.load %arg9[%c7_169, %c0_170, %c0_171] : memref<12x1x32xf32, #tpu.memory_space<vmem>>, vector<1x1x32xf32>
    %272 = vector.shape_cast %271 : vector<1x1x32xf32> to vector<1x32xf32>
    %c8_172 = arith.constant 8 : index
    %c0_173 = arith.constant 0 : index
    %c0_174 = arith.constant 0 : index
    %273 = vector.load %arg9[%c8_172, %c0_173, %c0_174] : memref<12x1x32xf32, #tpu.memory_space<vmem>>, vector<1x1x32xf32>
    %274 = vector.shape_cast %273 : vector<1x1x32xf32> to vector<1x32xf32>
    %cst_175 = arith.constant dense<0.000000e+00> : vector<16xf32>
    %275 = vector.multi_reduction <add>, %270, %cst_175 [1] : vector<16x32xf32> to vector<16xf32>
    %276 = vector.shape_cast %275 : vector<16xf32> to vector<16x1xf32>
    %cst_176 = arith.constant 3.200000e+01 : f32
    %277 = vector.broadcast %cst_176 : f32 to vector<16x1xf32>
    %278 = arith.divf %276, %277 : vector<16x1xf32>
    %279 = vector.broadcast %278 : vector<16x1xf32> to vector<16x32xf32>
    %280 = arith.subf %270, %279 : vector<16x32xf32>
    %281 = arith.mulf %280, %280 : vector<16x32xf32>
    %cst_177 = arith.constant dense<0.000000e+00> : vector<16xf32>
    %282 = vector.multi_reduction <add>, %281, %cst_177 [1] : vector<16x32xf32> to vector<16xf32>
    %283 = vector.shape_cast %282 : vector<16xf32> to vector<16x1xf32>
    %cst_178 = arith.constant 3.200000e+01 : f32
    %284 = vector.broadcast %cst_178 : f32 to vector<16x1xf32>
    %285 = arith.divf %283, %284 : vector<16x1xf32>
    %cst_179 = arith.constant 9.99999996E-13 : f32
    %286 = vector.broadcast %cst_179 : f32 to vector<16x1xf32>
    %287 = arith.addf %285, %286 : vector<16x1xf32>
    %288 = math.rsqrt %287 : vector<16x1xf32>
    %289 = vector.broadcast %288 : vector<16x1xf32> to vector<16x32xf32>
    %290 = arith.mulf %280, %289 : vector<16x32xf32>
    %291 = vector.broadcast %272 : vector<1x32xf32> to vector<16x32xf32>
    %292 = arith.mulf %290, %291 : vector<16x32xf32>
    %293 = vector.broadcast %274 : vector<1x32xf32> to vector<16x32xf32>
    %294 = arith.addf %292, %293 : vector<16x32xf32>
    %c2_180 = arith.constant 2 : index
    %c0_181 = arith.constant 0 : index
    %c0_182 = arith.constant 0 : index
    %295 = vector.load %arg7[%c2_180, %c0_181, %c0_182] : memref<4x32x64xf32, #tpu.memory_space<vmem>>, vector<1x32x64xf32>
    %296 = vector.shape_cast %295 : vector<1x32x64xf32> to vector<32x64xf32>
    %cst_183 = arith.constant dense<0.000000e+00> : vector<16x64xf32>
    %297 = tpu.matmul %294, %296, %cst_183 {dimension_numbers = #tpu.dot_dimension_numbers<[1], [0], [0], [1], [0, 0, 1, 1], [], []>} : vector<16x32xf32>, vector<32x64xf32>, vector<16x64xf32> -> vector<16x64xf32>
    %c1_184 = arith.constant 1 : index
    %c0_185 = arith.constant 0 : index
    %c0_186 = arith.constant 0 : index
    %298 = vector.load %arg8[%c1_184, %c0_185, %c0_186] : memref<2x1x64xf32, #tpu.memory_space<vmem>>, vector<1x1x64xf32>
    %299 = vector.shape_cast %298 : vector<1x1x64xf32> to vector<1x64xf32>
    %300 = vector.broadcast %299 : vector<1x64xf32> to vector<16x64xf32>
    %301 = arith.addf %297, %300 : vector<16x64xf32>
    %cst_187 = arith.constant 5.000000e-01 : f32
    %302 = vector.broadcast %cst_187 : f32 to vector<16x64xf32>
    %303 = arith.mulf %302, %301 : vector<16x64xf32>
    %cst_188 = arith.constant 4.471500e-02 : f32
    %304 = vector.broadcast %cst_188 : f32 to vector<16x64xf32>
    %305 = arith.mulf %304, %301 : vector<16x64xf32>
    %306 = arith.mulf %305, %301 : vector<16x64xf32>
    %307 = arith.mulf %306, %301 : vector<16x64xf32>
    %308 = arith.addf %301, %307 : vector<16x64xf32>
    %cst_189 = arith.constant 0.797884583 : f32
    %309 = vector.broadcast %cst_189 : f32 to vector<16x64xf32>
    %310 = arith.mulf %309, %308 : vector<16x64xf32>
    %311 = math.tanh %310 : vector<16x64xf32>
    %cst_190 = arith.constant 1.000000e+00 : f32
    %312 = vector.broadcast %cst_190 : f32 to vector<16x64xf32>
    %313 = arith.addf %312, %311 : vector<16x64xf32>
    %314 = arith.mulf %303, %313 : vector<16x64xf32>
    %c3_191 = arith.constant 3 : index
    %c0_192 = arith.constant 0 : index
    %c0_193 = arith.constant 0 : index
    %315 = vector.load %arg7[%c3_191, %c0_192, %c0_193] : memref<4x32x64xf32, #tpu.memory_space<vmem>>, vector<1x32x64xf32>
    %316 = vector.shape_cast %315 : vector<1x32x64xf32> to vector<32x64xf32>
    %cst_194 = arith.constant dense<0.000000e+00> : vector<16x32xf32>
    %317 = tpu.matmul %314, %316, %cst_194 {dimension_numbers = #tpu.dot_dimension_numbers<[1], [1], [0], [0], [0, 0, 1, 0], [], []>} : vector<16x64xf32>, vector<32x64xf32>, vector<16x32xf32> -> vector<16x32xf32>
    %c9_195 = arith.constant 9 : index
    %c0_196 = arith.constant 0 : index
    %c0_197 = arith.constant 0 : index
    %318 = vector.load %arg9[%c9_195, %c0_196, %c0_197] : memref<12x1x32xf32, #tpu.memory_space<vmem>>, vector<1x1x32xf32>
    %319 = vector.shape_cast %318 : vector<1x1x32xf32> to vector<1x32xf32>
    %320 = vector.broadcast %319 : vector<1x32xf32> to vector<16x32xf32>
    %321 = arith.addf %317, %320 : vector<16x32xf32>
    %322 = arith.addf %294, %321 : vector<16x32xf32>
    %c10_198 = arith.constant 10 : index
    %c0_199 = arith.constant 0 : index
    %c0_200 = arith.constant 0 : index
    %323 = vector.load %arg9[%c10_198, %c0_199, %c0_200] : memref<12x1x32xf32, #tpu.memory_space<vmem>>, vector<1x1x32xf32>
    %324 = vector.shape_cast %323 : vector<1x1x32xf32> to vector<1x32xf32>
    %c11_201 = arith.constant 11 : index
    %c0_202 = arith.constant 0 : index
    %c0_203 = arith.constant 0 : index
    %325 = vector.load %arg9[%c11_201, %c0_202, %c0_203] : memref<12x1x32xf32, #tpu.memory_space<vmem>>, vector<1x1x32xf32>
    %326 = vector.shape_cast %325 : vector<1x1x32xf32> to vector<1x32xf32>
    %cst_204 = arith.constant dense<0.000000e+00> : vector<16xf32>
    %327 = vector.multi_reduction <add>, %322, %cst_204 [1] : vector<16x32xf32> to vector<16xf32>
    %328 = vector.shape_cast %327 : vector<16xf32> to vector<16x1xf32>
    %cst_205 = arith.constant 3.200000e+01 : f32
    %329 = vector.broadcast %cst_205 : f32 to vector<16x1xf32>
    %330 = arith.divf %328, %329 : vector<16x1xf32>
    %331 = vector.broadcast %330 : vector<16x1xf32> to vector<16x32xf32>
    %332 = arith.subf %322, %331 : vector<16x32xf32>
    %333 = arith.mulf %332, %332 : vector<16x32xf32>
    %cst_206 = arith.constant dense<0.000000e+00> : vector<16xf32>
    %334 = vector.multi_reduction <add>, %333, %cst_206 [1] : vector<16x32xf32> to vector<16xf32>
    %335 = vector.shape_cast %334 : vector<16xf32> to vector<16x1xf32>
    %cst_207 = arith.constant 3.200000e+01 : f32
    %336 = vector.broadcast %cst_207 : f32 to vector<16x1xf32>
    %337 = arith.divf %335, %336 : vector<16x1xf32>
    %cst_208 = arith.constant 9.99999996E-13 : f32
    %338 = vector.broadcast %cst_208 : f32 to vector<16x1xf32>
    %339 = arith.addf %337, %338 : vector<16x1xf32>
    %340 = math.rsqrt %339 : vector<16x1xf32>
    %341 = vector.broadcast %340 : vector<16x1xf32> to vector<16x32xf32>
    %342 = arith.mulf %332, %341 : vector<16x32xf32>
    %343 = vector.broadcast %324 : vector<1x32xf32> to vector<16x32xf32>
    %344 = arith.mulf %342, %343 : vector<16x32xf32>
    %345 = vector.broadcast %326 : vector<1x32xf32> to vector<16x32xf32>
    %346 = arith.addf %344, %345 : vector<16x32xf32>
    %347 = tpu.iota {dimensions = array<i32: 0>} : vector<2x16xi32>
    %348 = tpu.iota {dimensions = array<i32: 1>} : vector<2x16xi32>
    %c8_i32 = arith.constant 8 : i32
    %349 = vector.broadcast %c8_i32 : i32 to vector<2x16xi32>
    %350 = arith.muli %347, %349 : vector<2x16xi32>
    %351 = arith.cmpi eq, %348, %350 : vector<2x16xi32>
    %352 = arith.extui %351 : vector<2x16xi1> to vector<2x16xi32>
    %353 = arith.sitofp %352 : vector<2x16xi32> to vector<2x16xf32>
    %cst_209 = arith.constant dense<0.000000e+00> : vector<2x32xf32>
    %354 = tpu.matmul %353, %346, %cst_209 {dimension_numbers = #tpu.dot_dimension_numbers<[1], [0], [0], [1], [0, 0, 1, 1], [], []>} : vector<2x16xf32>, vector<16x32xf32>, vector<2x32xf32> -> vector<2x32xf32>
    %c0_210 = arith.constant 0 : index
    %c0_211 = arith.constant 0 : index
    %355 = vector.load %arg11[%c0_210, %c0_211] : memref<32x32xf32, #tpu.memory_space<vmem>>, vector<32x32xf32>
    %cst_212 = arith.constant dense<0.000000e+00> : vector<2x32xf32>
    %356 = tpu.matmul %354, %355, %cst_212 {dimension_numbers = #tpu.dot_dimension_numbers<[1], [0], [0], [1], [0, 0, 1, 1], [], []>} : vector<2x32xf32>, vector<32x32xf32>, vector<2x32xf32> -> vector<2x32xf32>
    %c2_213 = arith.constant 2 : index
    %c0_214 = arith.constant 0 : index
    %c0_215 = arith.constant 0 : index
    %357 = vector.load %arg10[%c2_213, %c0_214, %c0_215] : memref<3x1x32xf32, #tpu.memory_space<vmem>>, vector<1x1x32xf32>
    %358 = vector.shape_cast %357 : vector<1x1x32xf32> to vector<1x32xf32>
    %359 = vector.broadcast %358 : vector<1x32xf32> to vector<2x32xf32>
    %360 = arith.addf %356, %359 : vector<2x32xf32>
    %cst_216 = arith.constant 0.000000e+00 : f32
    %361 = vector.broadcast %cst_216 : f32 to vector<2x32xf32>
    %362 = arith.maximumf %360, %361 : vector<2x32xf32>
    %c0_217 = arith.constant 0 : index
    %c0_218 = arith.constant 0 : index
    %363 = vector.load %arg12[%c0_217, %c0_218] : memref<32x128xf32, #tpu.memory_space<vmem>>, vector<32x128xf32>
    %cst_219 = arith.constant dense<0.000000e+00> : vector<2x128xf32>
    %364 = tpu.matmul %362, %363, %cst_219 {dimension_numbers = #tpu.dot_dimension_numbers<[1], [0], [0], [1], [0, 0, 1, 1], [], []>} : vector<2x32xf32>, vector<32x128xf32>, vector<2x128xf32> -> vector<2x128xf32>
    %c0_220 = arith.constant 0 : index
    %c0_221 = arith.constant 0 : index
    %365 = vector.load %arg13[%c0_220, %c0_221] : memref<1x128xf32, #tpu.memory_space<vmem>>, vector<1x128xf32>
    %366 = vector.broadcast %365 : vector<1x128xf32> to vector<2x128xf32>
    %367 = arith.addf %364, %366 : vector<2x128xf32>
    %c0_222 = arith.constant 0 : index
    %c0_223 = arith.constant 0 : index
    %368 = vector.load %arg14[%c0_222, %c0_223] : memref<2x128xf32, #tpu.memory_space<vmem>>, vector<2x128xf32>
    tpu.vector_store %arg14[%c0_222, %c0_223], %367 {strides = array<i32>} : memref<2x128xf32, #tpu.memory_space<vmem>>, vector<2x128xf32>,
    return
  }
}

</mosaic_0001>

<llo_original>
// kernel: eq.8
$region0: #{eq.8}
  %s0 = inlined_call_operand.vmem [shape: s32[2,8], index: 0, kind: input, shape index: {}]
  %s1 = inlined_call_operand.vmem [shape: s32[16], index: 1, kind: output, shape index: {}]
  $region1: #{eq.8} parent=0
    #allocation0 [shape = 'u8[4096]{0}', space=vmem, size = 0x1000, scoped, tag = 'scoped mem for output reshape']
    #allocation1 [shape = 'u8[4096]{0}', space=vmem, size = 0x1000, scoped, tag = 'scoped mem for input reshape']
    %s3 = ssub.s32 4, 1
    %v4 = vld [vmem:[%s0] sm:%s3]
    %5 = vst [vmem:[#allocation1] sm:%s3] %v4
    %v6 = vld [vmem:[#allocation1] sm:$0x1]
    %vm7 = vcmask 64512
    %8 = vst.msk [vmem:[#allocation0] sm:$0x1] %vm7, %v6
    %s9 = scalar_lea.vmem [#allocation1], 1
    %v10 = vld [vmem:[%s9] sm:$0x1]
    %11 = vrot.lane.b32.xlu0 %v10, 8
    %v12 = vpop.permute.xlu0 %11
    %vm13 = vcmask 130112
    %14 = vst.msk [vmem:[#allocation0] sm:$0x1] %vm13, %v12
    %s16 = ssub.s32 2, 1
    %v17 = vld [vmem:[#allocation0] sm:%s16]
    %s19 = ssub.s32 2, 1
    %20 = vst [vmem:[%s1] sm:%s19] %v17

// kernel: bert_classifier_forward.1
$region0: #{bert_classifier_forward.1}
  #allocation0 [shape = 'u32[]', space=smem, size = 0x4, offset = 0x4, fixed_abs, tag = 'smem constant byte address 0x4 - core index']
  #allocation1 [shape = 'u32[72,128]{1,0:T(1,128)}', space=vmem, size = 0x9000, scoped, tag = 'internal scratch']
  %s0 = inlined_call_operand.vmem [shape: s32[16,1], index: 0, kind: input, shape index: {}]
  %s1 = inlined_call_operand.vmem [shape: f32[16,16], index: 1, kind: input, shape index: {}]
  %s2 = inlined_call_operand.vmem [shape: f32[128,32], index: 2, kind: input, shape index: {}]
  %s3 = inlined_call_operand.vmem [shape: f32[16,32], index: 3, kind: input, shape index: {}]
  %s4 = inlined_call_operand.vmem [shape: f32[12,32,16], index: 4, kind: input, shape index: {}]
  %s5 = inlined_call_operand.vmem [shape: f32[12,1,16], index: 5, kind: input, shape index: {}]
  %s6 = inlined_call_operand.vmem [shape: f32[4,16,32], index: 6, kind: input, shape index: {}]
  %s7 = inlined_call_operand.vmem [shape: f32[4,32,64], index: 7, kind: input, shape index: {}]
  %s8 = inlined_call_operand.vmem [shape: f32[2,1,64], index: 8, kind: input, shape index: {}]
  %s9 = inlined_call_operand.vmem [shape: f32[12,1,32], index: 9, kind: input, shape index: {}]
  %s10 = inlined_call_operand.vmem [shape: f32[3,1,32], index: 10, kind: input, shape index: {}]
  %s11 = inlined_call_operand.vmem [shape: f32[32,32], index: 11, kind: input, shape index: {}]
  %s12 = inlined_call_operand.vmem [shape: f32[32,128], index: 12, kind: input, shape index: {}]
  %s13 = inlined_call_operand.vmem [shape: f32[1,128], index: 13, kind: input, shape index: {}]
  %s14 = inlined_call_operand.hbm [shape: f32[2,128], index: 14, kind: output, shape index: {}]
  %s15 = sld [smem:[#allocation0]]
  $region66: #{bert_classifier_forward.1} parent=0
    _
  %s17 = ssub.s32 1, %s15
  %s18 = scalar_select 0, %s17, %s15
  $region1: #{bert_classifier_forward.1} parent=0
    #allocation2 [shape = 'u8[1024]{0}', space=vmem, size = 0x400, scoped, tag = 'output window, operand 0, single buffered']
    #allocation3 [shape = 's32[1]{0}', space=sflag, size = 0x4, scoped, tag = 'scoped memory for bert_classifier_forward.1']
    %19 = vsyncpa [#allocation3], 0
    // Predicated region
    $region2: #{bert_classifier_forward.1} parent=1 // pred_check
      _
    $region3: #{bert_classifier_forward.1} parent=1 // pred_check_branch
      %21 = sbr.rel (0) target = $region5
    $region4: #{bert_classifier_forward.1} parent=1 // pred_region
      _
    $region5: #{bert_classifier_forward.1} parent=1 // pred_fallthru
      _
    // Predicated region
    $region6: #{bert_classifier_forward.1} parent=1 // pred_check
      _
    $region7: #{bert_classifier_forward.1} parent=1 // pred_check_branch
      %23 = sbr.rel (0) target = $region9
    $region8: #{bert_classifier_forward.1} parent=1 // pred_region
      _
    $region9: #{bert_classifier_forward.1} parent=1 // pred_fallthru
      _
    // Predicated region
    $region10: #{bert_classifier_forward.1} parent=1 // pred_check
      _
    $region11: #{bert_classifier_forward.1} parent=1 // pred_check_branch
      %25 = sbr.rel (0) target = $region13
    $region12: #{bert_classifier_forward.1} parent=1 // pred_region
      _
    $region13: #{bert_classifier_forward.1} parent=1 // pred_fallthru
      _
    // Predicated region
    $region14: #{bert_classifier_forward.1} parent=1 // pred_check
      _
    $region15: #{bert_classifier_forward.1} parent=1 // pred_check_branch
      %27 = sbr.rel (0) target = $region17
    $region16: #{bert_classifier_forward.1} parent=1 // pred_region
      _
    $region17: #{bert_classifier_forward.1} parent=1 // pred_fallthru
      _
    // Predicated region
    $region18: #{bert_classifier_forward.1} parent=1 // pred_check
      _
    $region19: #{bert_classifier_forward.1} parent=1 // pred_check_branch
      %29 = sbr.rel (0) target = $region21
    $region20: #{bert_classifier_forward.1} parent=1 // pred_region
      _
    $region21: #{bert_classifier_forward.1} parent=1 // pred_fallthru
      _
    // Predicated region
    $region22: #{bert_classifier_forward.1} parent=1 // pred_check
      _
    $region23: #{bert_classifier_forward.1} parent=1 // pred_check_branch
      %31 = sbr.rel (0) target = $region25
    $region24: #{bert_classifier_forward.1} parent=1 // pred_region
      _
    $region25: #{bert_classifier_forward.1} parent=1 // pred_fallthru
      _
    // Predicated region
    $region26: #{bert_classifier_forward.1} parent=1 // pred_check
      _
    $region27: #{bert_classifier_forward.1} parent=1 // pred_check_branch
      %33 = sbr.rel (0) target = $region29
    $region28: #{bert_classifier_forward.1} parent=1 // pred_region
      _
    $region29: #{bert_classifier_forward.1} parent=1 // pred_fallthru
      _
    // Predicated region
    $region30: #{bert_classifier_forward.1} parent=1 // pred_check
      _
    $region31: #{bert_classifier_forward.1} parent=1 // pred_check_branch
      %35 = sbr.rel (0) target = $region33
    $region32: #{bert_classifier_forward.1} parent=1 // pred_region
      _
    $region33: #{bert_classifier_forward.1} parent=1 // pred_fallthru
      _
    // Predicated region
    $region34: #{bert_classifier_forward.1} parent=1 // pred_check
      _
    $region35: #{bert_classifier_forward.1} parent=1 // pred_check_branch
      %37 = sbr.rel (0) target = $region37
    $region36: #{bert_classifier_forward.1} parent=1 // pred_region
      _
    $region37: #{bert_classifier_forward.1} parent=1 // pred_fallthru
      _
    // Predicated region
    $region38: #{bert_classifier_forward.1} parent=1 // pred_check
      _
    $region39: #{bert_classifier_forward.1} parent=1 // pred_check_branch
      %39 = sbr.rel (0) target = $region41
    $region40: #{bert_classifier_forward.1} parent=1 // pred_region
      _
    $region41: #{bert_classifier_forward.1} parent=1 // pred_fallthru
      _
    // Predicated region
    $region42: #{bert_classifier_forward.1} parent=1 // pred_check
      _
    $region43: #{bert_classifier_forward.1} parent=1 // pred_check_branch
      %41 = sbr.rel (0) target = $region45
    $region44: #{bert_classifier_forward.1} parent=1 // pred_region
      _
    $region45: #{bert_classifier_forward.1} parent=1 // pred_fallthru
      _
    // Predicated region
    $region46: #{bert_classifier_forward.1} parent=1 // pred_check
      _
    $region47: #{bert_classifier_forward.1} parent=1 // pred_check_branch
      %43 = sbr.rel (0) target = $region49
    $region48: #{bert_classifier_forward.1} parent=1 // pred_region
      _
    $region49: #{bert_classifier_forward.1} parent=1 // pred_fallthru
      _
    // Predicated region
    $region50: #{bert_classifier_forward.1} parent=1 // pred_check
      _
    $region51: #{bert_classifier_forward.1} parent=1 // pred_check_branch
      %45 = sbr.rel (0) target = $region53
    $region52: #{bert_classifier_forward.1} parent=1 // pred_region
      _
    $region53: #{bert_classifier_forward.1} parent=1 // pred_fallthru
      _
    // Predicated region
    $region54: #{bert_classifier_forward.1} parent=1 // pred_check
      _
    $region55: #{bert_classifier_forward.1} parent=1 // pred_check_branch
      %47 = sbr.rel (0) target = $region57
    $region56: #{bert_classifier_forward.1} parent=1 // pred_region
      _
    $region57: #{bert_classifier_forward.1} parent=1 // pred_fallthru
      _
    %v48 = vld [vmem:[%s0] sm:$0xff]
    %v49 = vld [vmem:[%s0 + $0x8] sm:$0xff]
    %v50 = vlaneseq
    %v51 = vand.u32 %v50, 127
    %52 = vset.pattern.permute.xlu0 0
    %53 = vperm.xlu0 %52, %v48
    %v54 = vpop.permute.xlu0 %53
    %55 = vset.pattern.permute.xlu0 0
    %56 = vperm.xlu0 %55, %v49
    %v57 = vpop.permute.xlu0 %56
    %vm58 = vcmp.eq.s32.totalorder %v51, %v54
    %vm59 = vcmp.eq.s32.totalorder %v51, %v57
    %v60 = vsel %vm58, 1, 0
    %v61 = vsel %vm59, 1, 0
    %v62 = vcvt.s32.f32 %v60
    %v63 = vcvt.s32.f32 %v61
    %v64 = vld [vmem:[%s2] sm:$0xff]
    %v65 = vld [vmem:[%s2 + $0x8] sm:$0xff]
    %v66 = vld [vmem:[%s2 + $0x10] sm:$0xff]
    %v67 = vld [vmem:[%s2 + $0x18] sm:$0xff]
    %v68 = vld [vmem:[%s2 + $0x20] sm:$0xff]
    %v69 = vld [vmem:[%s2 + $0x28] sm:$0xff]
    %v70 = vld [vmem:[%s2 + $0x30] sm:$0xff]
    %v71 = vld [vmem:[%s2 + $0x38] sm:$0xff]
    %v72 = vld [vmem:[%s2 + $0x40] sm:$0xff]
    %v73 = vld [vmem:[%s2 + $0x48] sm:$0xff]
    %v74 = vld [vmem:[%s2 + $0x50] sm:$0xff]
    %v75 = vld [vmem:[%s2 + $0x58] sm:$0xff]
    %v76 = vld [vmem:[%s2 + $0x60] sm:$0xff]
    %v77 = vld [vmem:[%s2 + $0x68] sm:$0xff]
    %v78 = vld [vmem:[%s2 + $0x70] sm:$0xff]
    %v79 = vld [vmem:[%s2 + $0x78] sm:$0xff]
    %v80 = vld [vmem:[%s3] sm:$0xff]
    %v81 = vld [vmem:[%s3 + $0x8] sm:$0xff]
    %82 = vmatpush.msra.mxu0 %v79
    %83 = vmatpush.msra.mxu0 %v78
    %84 = vmatpush.msra.mxu0 %v77
    %85 = vmatpush.msra.mxu0 %v76
    %86 = vmatpush.msra.mxu0 %v75
    %87 = vmatpush.msra.mxu0 %v74
    %88 = vmatpush.msra.mxu0 %v73
    %89 = vmatpush.msra.mxu0 %v72
    %90 = vmatpush.msra.mxu0 %v71
    %91 = vmatpush.msra.mxu0 %v70
    %92 = vmatpush.msra.mxu0 %v69
    %93 = vmatpush.msra.mxu0 %v68
    %94 = vmatpush.msra.mxu0 %v67
    %95 = vmatpush.msra.mxu0 %v66
    %96 = vmatpush.msra.mxu0 %v65
    %97 = vmatpush.msra.mxu0 %v64
    %98 = vmatmul.f32.gmra.mxu0 %v62
    %v99 = vpop.f32.mrf.mxu0
    %v100 = vadd.f32 %v80, %v99
    %101 = vmatmul.f32.gmra.mxu0 %v63
    %v102 = vpop.f32.mrf.mxu0
    %v103 = vadd.f32 %v81, %v102
    %104 = vdwg.mxu0
    %v105 = vld [vmem:[%s10] sm:$0x1]
    %s106 = scalar_lea.vmem %s10, 1
    %v107 = vld [vmem:[%s106] sm:$0x1]
    %vm108 = vcmask 261120
    %v109 = vsel %vm108, %v100, 0.0
    %110 = vadd.xlane.f32.xlu0 %v109
    %v111 = vpop.xlane.xlu0 %110
    %v112 = vsel %vm108, %v103, 0.0
    %113 = vadd.xlane.f32.xlu0 %v112
    %v114 = vpop.xlane.xlu0 %113
    %v115 = vrcp.pop 32.0
    %v116 = vmul.f32 32.0, %v115
    %v117 = vsub.f32 1.0, %v116
    %v118 = vmul.f32 %v115, %v117
    %v119 = vadd.f32 %v115, %v118
    %vm120 = vweird.f32 %v115
    %v121 = vsel %vm120, %v115, %v119
    %v122 = vmul.f32 %v111, %v121
    %v123 = vmul.f32 %v114, %v121
    %v124 = vsub.f32 %v100, %v122
    %v125 = vsub.f32 %v103, %v123
    %v126 = vmul.f32 %v124, %v124
    %v127 = vmul.f32 %v125, %v125
    %v128 = vsel %vm108, %v126, 0.0
    %129 = vadd.xlane.f32.xlu0 %v128
    %v130 = vpop.xlane.xlu0 %129
    %v131 = vsel %vm108, %v127, 0.0
    %132 = vadd.xlane.f32.xlu0 %v131
    %v133 = vpop.xlane.xlu0 %132
    %v134 = vmul.f32 %v130, %v121
    %v135 = vmul.f32 %v133, %v121
    %v136 = vadd.f32 %v134, 1e-12
    %v137 = vadd.f32 %v135, 1e-12
    %v138 = vrsqrt.pop %v136
    %v139 = vmul.f32 %v138, %v136
    %v140 = vmul.f32 %v139, %v138
    %v141 = vmul.f32 0.5, %v140
    %v142 = vsub.f32 1.5, %v141
    %v143 = vmul.f32 %v138, %v142
    %vm144 = vweird.f32 %v136
    %vm145 = vweird.f32 %v138
    %vm146 = vmor %vm144, %vm145
    %v147 = vsel %vm146, %v138, %v143
    %v148 = vrsqrt.pop %v137
    %v149 = vmul.f32 %v148, %v137
    %v150 = vmul.f32 %v149, %v148
    %v151 = vmul.f32 0.5, %v150
    %v152 = vsub.f32 1.5, %v151
    %v153 = vmul.f32 %v148, %v152
    %vm154 = vweird.f32 %v137
    %vm155 = vweird.f32 %v148
    %vm156 = vmor %vm154, %vm155
    %v157 = vsel %vm156, %v148, %v153
    %v158 = vmul.f32 %v124, %v147
    %v159 = vmul.f32 %v125, %v157
    %v161 = vperm.slane %v105, 0
    %v163 = vmul.f32 %v158, %v161
    %v164 = vmul.f32 %v159, %v161
    %v166 = vperm.slane %v107, 0
    %v168 = vadd.f32 %v163, %v166
    %v169 = vadd.f32 %v164, %v166
    %v170 = vld [vmem:[%s1] sm:$0xff]
    %v171 = vld [vmem:[%s1 + $0x8] sm:$0xff]
    %v172 = vld [vmem:[%s4] sm:$0xff]
    %v173 = vld [vmem:[%s4 + $0x8] sm:$0xff]
    %v174 = vld [vmem:[%s4 + $0x10] sm:$0xff]
    %v175 = vld [vmem:[%s4 + $0x18] sm:$0xff]
    %v176 = vld [vmem:[%s5] sm:$0x1]
    %v178 = vperm.slane %v176, 0
    %v181 = vsel %vm108, %v168, 0
    %v184 = vsel %vm108, %v169, 0
    %186 = vmatpush.msra.mxu0 0.0
    %187 = vmatpush.msra.mxu0 0.0
    %188 = vmatpush.msra.mxu0 0.0
    %189 = vmatpush.msra.mxu0 0.0
    %190 = vmatpush.msra.mxu0 0.0
    %191 = vmatpush.msra.mxu0 0.0
    %192 = vmatpush.msra.mxu0 0.0
    %193 = vmatpush.msra.mxu0 0.0
    %194 = vmatpush.msra.mxu0 0.0
    %195 = vmatpush.msra.mxu0 0.0
    %196 = vmatpush.msra.mxu0 0.0
    %197 = vmatpush.msra.mxu0 0.0
    %198 = vmatpush.msra.mxu0 %v175
    %199 = vmatpush.msra.mxu0 %v174
    %200 = vmatpush.msra.mxu0 %v173
    %201 = vmatpush.msra.mxu0 %v172
    %202 = vmatmul.f32.gmra.mxu0 %v181
    %v203 = vpop.f32.mrf.mxu0
    %v204 = vadd.f32 %v178, %v203
    %205 = vmatmul.f32.gmra.mxu0 %v184
    %v206 = vpop.f32.mrf.mxu0
    %v207 = vadd.f32 %v178, %v206
    %208 = vdwg.mxu0
    %s209 = scalar_lea.vmem %s4, 64
    %v210 = vld [vmem:[%s209] sm:$0xff]
    %v211 = vld [vmem:[%s209 + $0x8] sm:$0xff]
    %v212 = vld [vmem:[%s209 + $0x10] sm:$0xff]
    %v213 = vld [vmem:[%s209 + $0x18] sm:$0xff]
    %s214 = scalar_lea.vmem %s5, 2
    %v215 = vld [vmem:[%s214] sm:$0x1]
    %v217 = vperm.slane %v215, 0
    %219 = vmatpush.msra.mxu0 0.0
    %220 = vmatpush.msra.mxu0 0.0
    %221 = vmatpush.msra.mxu0 0.0
    %222 = vmatpush.msra.mxu0 0.0
    %223 = vmatpush.msra.mxu0 0.0
    %224 = vmatpush.msra.mxu0 0.0
    %225 = vmatpush.msra.mxu0 0.0
    %226 = vmatpush.msra.mxu0 0.0
    %227 = vmatpush.msra.mxu0 0.0
    %228 = vmatpush.msra.mxu0 0.0
    %229 = vmatpush.msra.mxu0 0.0
    %230 = vmatpush.msra.mxu0 0.0
    %231 = vmatpush.msra.mxu0 %v213
    %232 = vmatpush.msra.mxu0 %v212
    %233 = vmatpush.msra.mxu0 %v211
    %234 = vmatpush.msra.mxu0 %v210
    %235 = vmatmul.f32.gmra.mxu0 %v181
    %v236 = vpop.f32.mrf.mxu0
    %v237 = vadd.f32 %v217, %v236
    %238 = vmatmul.f32.gmra.mxu0 %v184
    %v239 = vpop.f32.mrf.mxu0
    %v240 = vadd.f32 %v217, %v239
    %241 = vdwg.mxu0
    %s242 = scalar_lea.vmem %s4, 128
    %v243 = vld [vmem:[%s242] sm:$0xff]
    %v244 = vld [vmem:[%s242 + $0x8] sm:$0xff]
    %v245 = vld [vmem:[%s242 + $0x10] sm:$0xff]
    %v246 = vld [vmem:[%s242 + $0x18] sm:$0xff]
    %s247 = scalar_lea.vmem %s5, 4
    %v248 = vld [vmem:[%s247] sm:$0x1]
    %v250 = vperm.slane %v248, 0
    %252 = vmatpush.msra.mxu0 0.0
    %253 = vmatpush.msra.mxu0 0.0
    %254 = vmatpush.msra.mxu0 0.0
    %255 = vmatpush.msra.mxu0 0.0
    %256 = vmatpush.msra.mxu0 0.0
    %257 = vmatpush.msra.mxu0 0.0
    %258 = vmatpush.msra.mxu0 0.0
    %259 = vmatpush.msra.mxu0 0.0
    %260 = vmatpush.msra.mxu0 0.0
    %261 = vmatpush.msra.mxu0 0.0
    %262 = vmatpush.msra.mxu0 0.0
    %263 = vmatpush.msra.mxu0 0.0
    %264 = vmatpush.msra.mxu0 %v246
    %265 = vmatpush.msra.mxu0 %v245
    %266 = vmatpush.msra.mxu0 %v244
    %267 = vmatpush.msra.mxu0 %v243
    %268 = vmatmul.f32.gmra.mxu0 %v181
    %v269 = vpop.f32.mrf.mxu0
    %v270 = vadd.f32 %v250, %v269
    %271 = vmatmul.f32.gmra.mxu0 %v184
    %v272 = vpop.f32.mrf.mxu0
    %v273 = vadd.f32 %v250, %v272
    %274 = vdwg.mxu0
    %vm275 = vcmask 130048
    %v277 = vsel %vm275, %v204, 0
    %v280 = vsel %vm275, %v207, 0
    %v283 = vsel %vm275, %v237, 0
    %v286 = vsel %vm275, %v240, 0
    %288 = vmatpush.xpose.msra.mxu0 0.0
    %289 = vmatpush.xpose.msra.mxu0 0.0
    %290 = vmatpush.xpose.msra.mxu0 0.0
    %291 = vmatpush.xpose.msra.mxu0 0.0
    %292 = vmatpush.xpose.msra.mxu0 0.0
    %293 = vmatpush.xpose.msra.mxu0 0.0
    %294 = vmatpush.xpose.msra.mxu0 0.0
    %295 = vmatpush.xpose.msra.mxu0 0.0
    %296 = vmatpush.xpose.msra.mxu0 0.0
    %297 = vmatpush.xpose.msra.mxu0 0.0
    %298 = vmatpush.xpose.msra.mxu0 0.0
    %299 = vmatpush.xpose.msra.mxu0 0.0
    %300 = vmatpush.xpose.msra.mxu0 0.0
    %301 = vmatpush.xpose.msra.mxu0 0.0
    %302 = vmatpush.xpose.msra.mxu0 %v286
    %303 = vmatpush.xpose.msra.mxu0 %v283
    %304 = vmatmul.f32.gmra.mxu0 %v277
    %v305 = vpop.f32.mrf.mxu0
    %v306 = vadd.f32 %v170, %v305
    %307 = vmatmul.f32.gmra.mxu0 %v280
    %v308 = vpop.f32.mrf.mxu0
    %v309 = vadd.f32 %v171, %v308
    %310 = vdwg.mxu0
    %v311 = vsel %vm275, %v306, -inf
    %312 = vmax.xlane.f32.xlu0 %v311
    %v313 = vpop.xlane.xlu0 %312
    %v314 = vsel %vm275, %v309, -inf
    %315 = vmax.xlane.f32.xlu0 %v314
    %v316 = vpop.xlane.xlu0 %315
    %v317 = vsub.f32 %v306, %v313
    %v318 = vsub.f32 %v309, %v316
    %v319 = vmul.f32 %v317, 1.442695
    %v320 = vpow.pop %v319
    %v321 = vmul.f32 %v318, 1.442695
    %v322 = vpow.pop %v321
    %v323 = vsel %vm275, %v320, 0.0
    %324 = vadd.xlane.f32.xlu0 %v323
    %v325 = vpop.xlane.xlu0 %324
    %v326 = vsel %vm275, %v322, 0.0
    %327 = vadd.xlane.f32.xlu0 %v326
    %v328 = vpop.xlane.xlu0 %327
    %v329 = vrcp.pop %v325
    %v330 = vrcp.pop %v328
    %v331 = vmul.f32 %v320, %v329
    %v332 = vmul.f32 %v322, %v330
    %v334 = vsel %vm275, %v331, 0
    %v337 = vsel %vm275, %v332, 0
    %339 = vmatpush.msra.mxu0 0.0
    %340 = vmatpush.msra.mxu0 0.0
    %341 = vmatpush.msra.mxu0 0.0
    %342 = vmatpush.msra.mxu0 0.0
    %343 = vmatpush.msra.mxu0 0.0
    %344 = vmatpush.msra.mxu0 0.0
    %345 = vmatpush.msra.mxu0 0.0
    %346 = vmatpush.msra.mxu0 0.0
    %347 = vmatpush.msra.mxu0 0.0
    %348 = vmatpush.msra.mxu0 0.0
    %349 = vmatpush.msra.mxu0 0.0
    %350 = vmatpush.msra.mxu0 0.0
    %351 = vmatpush.msra.mxu0 0.0
    %352 = vmatpush.msra.mxu0 0.0
    %353 = vmatpush.msra.mxu0 %v273
    %354 = vmatpush.msra.mxu0 %v270
    %355 = vmatmul.f32.gmra.mxu0 %v334
    %v356 = vpop.f32.mrf.mxu0
    %v357 = vadd.f32 0.0, %v356
    %358 = vmatmul.f32.gmra.mxu0 %v337
    %v359 = vpop.f32.mrf.mxu0
    %v360 = vadd.f32 0.0, %v359
    %361 = vdwg.mxu0
    %v362 = vld [vmem:[%s6] sm:$0xff]
    %v363 = vld [vmem:[%s6 + $0x8] sm:$0xff]
    %s364 = scalar_lea.vmem %s4, 32
    %v365 = vld [vmem:[%s364] sm:$0xff]
    %v366 = vld [vmem:[%s364 + $0x8] sm:$0xff]
    %v367 = vld [vmem:[%s364 + $0x10] sm:$0xff]
    %v368 = vld [vmem:[%s364 + $0x18] sm:$0xff]
    %s369 = scalar_lea.vmem %s5, 1
    %v370 = vld [vmem:[%s369] sm:$0x1]
    %v372 = vperm.slane %v370, 0
    %374 = vmatpush.msra.mxu0 0.0
    %375 = vmatpush.msra.mxu0 0.0
    %376 = vmatpush.msra.mxu0 0.0
    %377 = vmatpush.msra.mxu0 0.0
    %378 = vmatpush.msra.mxu0 0.0
    %379 = vmatpush.msra.mxu0 0.0
    %380 = vmatpush.msra.mxu0 0.0
    %381 = vmatpush.msra.mxu0 0.0
    %382 = vmatpush.msra.mxu0 0.0
    %383 = vmatpush.msra.mxu0 0.0
    %384 = vmatpush.msra.mxu0 0.0
    %385 = vmatpush.msra.mxu0 0.0
    %386 = vmatpush.msra.mxu0 %v368
    %387 = vmatpush.msra.mxu0 %v367
    %388 = vmatpush.msra.mxu0 %v366
    %389 = vmatpush.msra.mxu0 %v365
    %390 = vmatmul.f32.gmra.mxu0 %v181
    %v391 = vpop.f32.mrf.mxu0
    %v392 = vadd.f32 %v372, %v391
    %393 = vmatmul.f32.gmra.mxu0 %v184
    %v394 = vpop.f32.mrf.mxu0
    %v395 = vadd.f32 %v372, %v394
    %396 = vdwg.mxu0
    %s397 = scalar_lea.vmem %s4, 96
    %v398 = vld [vmem:[%s397] sm:$0xff]
    %v399 = vld [vmem:[%s397 + $0x8] sm:$0xff]
    %v400 = vld [vmem:[%s397 + $0x10] sm:$0xff]
    %v401 = vld [vmem:[%s397 + $0x18] sm:$0xff]
    %s402 = scalar_lea.vmem %s5, 3
    %v403 = vld [vmem:[%s402] sm:$0x1]
    %v405 = vperm.slane %v403, 0
    %407 = vmatpush.msra.mxu0 0.0
    %408 = vmatpush.msra.mxu0 0.0
    %409 = vmatpush.msra.mxu0 0.0
    %410 = vmatpush.msra.mxu0 0.0
    %411 = vmatpush.msra.mxu0 0.0
    %412 = vmatpush.msra.mxu0 0.0
    %413 = vmatpush.msra.mxu0 0.0
    %414 = vmatpush.msra.mxu0 0.0
    %415 = vmatpush.msra.mxu0 0.0
    %416 = vmatpush.msra.mxu0 0.0
    %417 = vmatpush.msra.mxu0 0.0
    %418 = vmatpush.msra.mxu0 0.0
    %419 = vmatpush.msra.mxu0 %v401
    %420 = vmatpush.msra.mxu0 %v400
    %421 = vmatpush.msra.mxu0 %v399
    %422 = vmatpush.msra.mxu0 %v398
    %423 = vmatmul.f32.gmra.mxu0 %v181
    %v424 = vpop.f32.mrf.mxu0
    %v425 = vadd.f32 %v405, %v424
    %426 = vmatmul.f32.gmra.mxu0 %v184
    %v427 = vpop.f32.mrf.mxu0
    %v428 = vadd.f32 %v405, %v427
    %429 = vdwg.mxu0
    %s430 = scalar_lea.vmem %s4, 160
    %v431 = vld [vmem:[%s430] sm:$0xff]
    %v432 = vld [vmem:[%s430 + $0x8] sm:$0xff]
    %v433 = vld [vmem:[%s430 + $0x10] sm:$0xff]
    %v434 = vld [vmem:[%s430 + $0x18] sm:$0xff]
    %s435 = scalar_lea.vmem %s5, 5
    %v436 = vld [vmem:[%s435] sm:$0x1]
    %v438 = vperm.slane %v436, 0
    %440 = vmatpush.msra.mxu0 0.0
    %441 = vmatpush.msra.mxu0 0.0
    %442 = vmatpush.msra.mxu0 0.0
    %443 = vmatpush.msra.mxu0 0.0
    %444 = vmatpush.msra.mxu0 0.0
    %445 = vmatpush.msra.mxu0 0.0
    %446 = vmatpush.msra.mxu0 0.0
    %447 = vmatpush.msra.mxu0 0.0
    %448 = vmatpush.msra.mxu0 0.0
    %449 = vmatpush.msra.mxu0 0.0
    %450 = vmatpush.msra.mxu0 0.0
    %451 = vmatpush.msra.mxu0 0.0
    %452 = vmatpush.msra.mxu0 %v434
    %453 = vmatpush.msra.mxu0 %v433
    %454 = vmatpush.msra.mxu0 %v432
    %455 = vmatpush.msra.mxu0 %v431
    %456 = vmatmul.f32.gmra.mxu0 %v181
    %v457 = vpop.f32.mrf.mxu0
    %v458 = vadd.f32 %v438, %v457
    %459 = vmatmul.f32.gmra.mxu0 %v184
    %v460 = vpop.f32.mrf.mxu0
    %v461 = vadd.f32 %v438, %v460
    %462 = vdwg.mxu0
    %v464 = vsel %vm275, %v392, 0
    %v467 = vsel %vm275, %v395, 0
    %v470 = vsel %vm275, %v425, 0
    %v473 = vsel %vm275, %v428, 0
    %475 = vmatpush.xpose.msra.mxu0 0.0
    %476 = vmatpush.xpose.msra.mxu0 0.0
    %477 = vmatpush.xpose.msra.mxu0 0.0
    %478 = vmatpush.xpose.msra.mxu0 0.0
    %479 = vmatpush.xpose.msra.mxu0 0.0
    %480 = vmatpush.xpose.msra.mxu0 0.0
    %481 = vmatpush.xpose.msra.mxu0 0.0
    %482 = vmatpush.xpose.msra.mxu0 0.0
    %483 = vmatpush.xpose.msra.mxu0 0.0
    %484 = vmatpush.xpose.msra.mxu0 0.0
    %485 = vmatpush.xpose.msra.mxu0 0.0
    %486 = vmatpush.xpose.msra.mxu0 0.0
    %487 = vmatpush.xpose.msra.mxu0 0.0
    %488 = vmatpush.xpose.msra.mxu0 0.0
    %489 = vmatpush.xpose.msra.mxu0 %v473
    %490 = vmatpush.xpose.msra.mxu0 %v470
    %491 = vmatmul.f32.gmra.mxu0 %v464
    %v492 = vpop.f32.mrf.mxu0
    %v493 = vadd.f32 %v170, %v492
    %494 = vmatmul.f32.gmra.mxu0 %v467
    %v495 = vpop.f32.mrf.mxu0
    %v496 = vadd.f32 %v171, %v495
    %497 = vdwg.mxu0
    %v498 = vsel %vm275, %v493, -inf
    %499 = vmax.xlane.f32.xlu0 %v498
    %v500 = vpop.xlane.xlu0 %499
    %v501 = vsel %vm275, %v496, -inf
    %502 = vmax.xlane.f32.xlu0 %v501
    %v503 = vpop.xlane.xlu0 %502
    %v504 = vsub.f32 %v493, %v500
    %v505 = vsub.f32 %v496, %v503
    %v506 = vmul.f32 %v504, 1.442695
    %v507 = vpow.pop %v506
    %v508 = vmul.f32 %v505, 1.442695
    %v509 = vpow.pop %v508
    %v510 = vsel %vm275, %v507, 0.0
    %511 = vadd.xlane.f32.xlu0 %v510
    %v512 = vpop.xlane.xlu0 %511
    %v513 = vsel %vm275, %v509, 0.0
    %514 = vadd.xlane.f32.xlu0 %v513
    %v515 = vpop.xlane.xlu0 %514
    %v516 = vrcp.pop %v512
    %v517 = vrcp.pop %v515
    %v518 = vmul.f32 %v507, %v516
    %v519 = vmul.f32 %v509, %v517
    %v521 = vsel %vm275, %v518, 0
    %v524 = vsel %vm275, %v519, 0
    %526 = vmatpush.msra.mxu0 0.0
    %527 = vmatpush.msra.mxu0 0.0
    %528 = vmatpush.msra.mxu0 0.0
    %529 = vmatpush.msra.mxu0 0.0
    %530 = vmatpush.msra.mxu0 0.0
    %531 = vmatpush.msra.mxu0 0.0
    %532 = vmatpush.msra.mxu0 0.0
    %533 = vmatpush.msra.mxu0 0.0
    %534 = vmatpush.msra.mxu0 0.0
    %535 = vmatpush.msra.mxu0 0.0
    %536 = vmatpush.msra.mxu0 0.0
    %537 = vmatpush.msra.mxu0 0.0
    %538 = vmatpush.msra.mxu0 0.0
    %539 = vmatpush.msra.mxu0 0.0
    %540 = vmatpush.msra.mxu0 %v461
    %541 = vmatpush.msra.mxu0 %v458
    %542 = vmatmul.f32.gmra.mxu0 %v521
    %v543 = vpop.f32.mrf.mxu0
    %v544 = vadd.f32 0.0, %v543
    %545 = vmatmul.f32.gmra.mxu0 %v524
    %v546 = vpop.f32.mrf.mxu0
    %v547 = vadd.f32 0.0, %v546
    %548 = vdwg.mxu0
    %s549 = scalar_lea.vmem %s6, 16
    %v550 = vld [vmem:[%s549] sm:$0xff]
    %v551 = vld [vmem:[%s549 + $0x8] sm:$0xff]
    %v553 = vsel %vm275, %v544, 0
    %v556 = vsel %vm275, %v547, 0
    %558 = vmatpush.msra.mxu0 0.0
    %559 = vmatpush.msra.mxu0 0.0
    %560 = vmatpush.msra.mxu0 0.0
    %561 = vmatpush.msra.mxu0 0.0
    %562 = vmatpush.msra.mxu0 0.0
    %563 = vmatpush.msra.mxu0 0.0
    %564 = vmatpush.msra.mxu0 0.0
    %565 = vmatpush.msra.mxu0 0.0
    %566 = vmatpush.msra.mxu0 0.0
    %567 = vmatpush.msra.mxu0 0.0
    %568 = vmatpush.msra.mxu0 0.0
    %569 = vmatpush.msra.mxu0 0.0
    %570 = vmatpush.msra.mxu0 0.0
    %571 = vmatpush.msra.mxu0 0.0
    %572 = vmatpush.msra.mxu0 %v551
    %573 = vmatpush.msra.mxu0 %v550
    %574 = vmatmul.f32.gmra.mxu0 %v553
    %v575 = vpop.f32.mrf.mxu0
    %v576 = vadd.f32 0.0, %v575
    %577 = vmatmul.f32.gmra.mxu0 %v556
    %v578 = vpop.f32.mrf.mxu0
    %v579 = vadd.f32 0.0, %v578
    %580 = vdwg.mxu0
    %v582 = vsel %vm275, %v357, 0
    %v585 = vsel %vm275, %v360, 0
    %587 = vmatpush.msra.mxu0 0.0
    %588 = vmatpush.msra.mxu0 0.0
    %589 = vmatpush.msra.mxu0 0.0
    %590 = vmatpush.msra.mxu0 0.0
    %591 = vmatpush.msra.mxu0 0.0
    %592 = vmatpush.msra.mxu0 0.0
    %593 = vmatpush.msra.mxu0 0.0
    %594 = vmatpush.msra.mxu0 0.0
    %595 = vmatpush.msra.mxu0 0.0
    %596 = vmatpush.msra.mxu0 0.0
    %597 = vmatpush.msra.mxu0 0.0
    %598 = vmatpush.msra.mxu0 0.0
    %599 = vmatpush.msra.mxu0 0.0
    %600 = vmatpush.msra.mxu0 0.0
    %601 = vmatpush.msra.mxu0 %v363
    %602 = vmatpush.msra.mxu0 %v362
    %603 = vmatmul.f32.gmra.mxu0 %v582
    %v604 = vpop.f32.mrf.mxu0
    %v605 = vadd.f32 %v576, %v604
    %606 = vmatmul.f32.gmra.mxu0 %v585
    %v607 = vpop.f32.mrf.mxu0
    %v608 = vadd.f32 %v579, %v607
    %609 = vdwg.mxu0
    %v610 = vld [vmem:[%s9] sm:$0x1]
    %v612 = vperm.slane %v610, 0
    %v614 = vadd.f32 %v605, %v612
    %v615 = vadd.f32 %v608, %v612
    %v616 = vadd.f32 %v168, %v614
    %v617 = vadd.f32 %v169, %v615
    %s618 = scalar_lea.vmem %s9, 1
    %v619 = vld [vmem:[%s618] sm:$0x1]
    %s620 = scalar_lea.vmem %s9, 2
    %v621 = vld [vmem:[%s620] sm:$0x1]
    %v622 = vsel %vm108, %v616, 0.0
    %623 = vadd.xlane.f32.xlu0 %v622
    %v624 = vpop.xlane.xlu0 %623
    %v625 = vsel %vm108, %v617, 0.0
    %626 = vadd.xlane.f32.xlu0 %v625
    %v627 = vpop.xlane.xlu0 %626
    %v628 = vmul.f32 %v624, %v121
    %v629 = vmul.f32 %v627, %v121
    %v630 = vsub.f32 %v616, %v628
    %v631 = vsub.f32 %v617, %v629
    %v632 = vmul.f32 %v630, %v630
    %v633 = vmul.f32 %v631, %v631
    %v634 = vsel %vm108, %v632, 0.0
    %635 = vadd.xlane.f32.xlu0 %v634
    %v636 = vpop.xlane.xlu0 %635
    %v637 = vsel %vm108, %v633, 0.0
    %638 = vadd.xlane.f32.xlu0 %v637
    %v639 = vpop.xlane.xlu0 %638
    %v640 = vmul.f32 %v636, %v121
    %v641 = vmul.f32 %v639, %v121
    %v642 = vadd.f32 %v640, 1e-12
    %v643 = vadd.f32 %v641, 1e-12
    %v644 = vrsqrt.pop %v642
    %v645 = vmul.f32 %v644, %v642
    %v646 = vmul.f32 %v645, %v644
    %v647 = vmul.f32 0.5, %v646
    %v648 = vsub.f32 1.5, %v647
    %v649 = vmul.f32 %v644, %v648
    %vm650 = vweird.f32 %v642
    %vm651 = vweird.f32 %v644
    %vm652 = vmor %vm650, %vm651
    %v653 = vsel %vm652, %v644, %v649
    %v654 = vrsqrt.pop %v643
    %v655 = vmul.f32 %v654, %v643
    %v656 = vmul.f32 %v655, %v654
    %v657 = vmul.f32 0.5, %v656
    %v658 = vsub.f32 1.5, %v657
    %v659 = vmul.f32 %v654, %v658
    %vm660 = vweird.f32 %v643
    %vm661 = vweird.f32 %v654
    %vm662 = vmor %vm660, %vm661
    %v663 = vsel %vm662, %v654, %v659
    %v664 = vmul.f32 %v630, %v653
    %v665 = vmul.f32 %v631, %v663
    %v667 = vperm.slane %v619, 0
    %v669 = vmul.f32 %v664, %v667
    %v670 = vmul.f32 %v665, %v667
    %v672 = vperm.slane %v621, 0
    %v674 = vadd.f32 %v669, %v672
    %v675 = vadd.f32 %v670, %v672
    %v676 = vld [vmem:[%s7] sm:$0xff]
    %v677 = vld [vmem:[%s7 + $0x8] sm:$0xff]
    %v678 = vld [vmem:[%s7 + $0x10] sm:$0xff]
    %v679 = vld [vmem:[%s7 + $0x18] sm:$0xff]
    %v680 = vld [vmem:[%s8] sm:$0x1]
    %v682 = vperm.slane %v680, 0
    %v685 = vsel %vm108, %v674, 0
    %v688 = vsel %vm108, %v675, 0
    %690 = vmatpush.msra.mxu0 0.0
    %691 = vmatpush.msra.mxu0 0.0
    %692 = vmatpush.msra.mxu0 0.0
    %693 = vmatpush.msra.mxu0 0.0
    %694 = vmatpush.msra.mxu0 0.0
    %695 = vmatpush.msra.mxu0 0.0
    %696 = vmatpush.msra.mxu0 0.0
    %697 = vmatpush.msra.mxu0 0.0
    %698 = vmatpush.msra.mxu0 0.0
    %699 = vmatpush.msra.mxu0 0.0
    %700 = vmatpush.msra.mxu0 0.0
    %701 = vmatpush.msra.mxu0 0.0
    %702 = vmatpush.msra.mxu0 %v679
    %703 = vmatpush.msra.mxu0 %v678
    %704 = vmatpush.msra.mxu0 %v677
    %705 = vmatpush.msra.mxu0 %v676
    %706 = vmatmul.f32.gmra.mxu0 %v685
    %v707 = vpop.f32.mrf.mxu0
    %v708 = vadd.f32 %v682, %v707
    %709 = vmatmul.f32.gmra.mxu0 %v688
    %v710 = vpop.f32.mrf.mxu0
    %v711 = vadd.f32 %v682, %v710
    %712 = vdwg.mxu0
    %v713 = vmul.f32 %v708, 0.5
    %v714 = vmul.f32 %v711, 0.5
    %v715 = vmul.f32 %v708, 0.044715
    %v716 = vmul.f32 %v711, 0.044715
    %v717 = vmul.f32 %v715, %v708
    %v718 = vmul.f32 %v716, %v711
    %v719 = vmul.f32 %v717, %v708
    %v720 = vmul.f32 %v718, %v711
    %v721 = vadd.f32 %v708, %v719
    %v722 = vadd.f32 %v711, %v720
    %v723 = vmul.f32 %v721, 0.7978846
    %v724 = vmul.f32 %v722, 0.7978846
    %v725 = vtanh.pop %v723
    %v726 = vtanh.pop %v724
    %v727 = vadd.f32 %v725, 1.0
    %v728 = vadd.f32 %v726, 1.0
    %v729 = vmul.f32 %v713, %v727
    %v730 = vmul.f32 %v714, %v728
    %s731 = scalar_lea.vmem %s7, 32
    %v732 = vld [vmem:[%s731] sm:$0xff]
    %v733 = vld [vmem:[%s731 + $0x8] sm:$0xff]
    %v734 = vld [vmem:[%s731 + $0x10] sm:$0xff]
    %v735 = vld [vmem:[%s731 + $0x18] sm:$0xff]
    %s736 = scalar_lea.vmem %s9, 3
    %v737 = vld [vmem:[%s736] sm:$0x1]
    %v739 = vperm.slane %v737, 0
    %vm741 = vcmask 523264
    %v743 = vsel %vm741, %v729, 0
    %v746 = vsel %vm741, %v730, 0
    %v749 = vsel %vm741, %v732, 0
    %v752 = vsel %vm741, %v733, 0
    %v755 = vsel %vm741, %v734, 0
    %v758 = vsel %vm741, %v735, 0
    %760 = vmatpush.xpose.msra.mxu0 0.0
    %761 = vmatpush.xpose.msra.mxu0 0.0
    %762 = vmatpush.xpose.msra.mxu0 0.0
    %763 = vmatpush.xpose.msra.mxu0 0.0
    %764 = vmatpush.xpose.msra.mxu0 0.0
    %765 = vmatpush.xpose.msra.mxu0 0.0
    %766 = vmatpush.xpose.msra.mxu0 0.0
    %767 = vmatpush.xpose.msra.mxu0 0.0
    %768 = vmatpush.xpose.msra.mxu0 0.0
    %769 = vmatpush.xpose.msra.mxu0 0.0
    %770 = vmatpush.xpose.msra.mxu0 0.0
    %771 = vmatpush.xpose.msra.mxu0 0.0
    %772 = vmatpush.xpose.msra.mxu0 %v758
    %773 = vmatpush.xpose.msra.mxu0 %v755
    %774 = vmatpush.xpose.msra.mxu0 %v752
    %775 = vmatpush.xpose.msra.mxu0 %v749
    %776 = vmatmul.f32.gmra.mxu0 %v743
    %v777 = vpop.f32.mrf.mxu0
    %v778 = vadd.f32 %v739, %v777
    %779 = vmatmul.f32.gmra.mxu0 %v746
    %v780 = vpop.f32.mrf.mxu0
    %v781 = vadd.f32 %v739, %v780
    %782 = vdwg.mxu0
    %v783 = vadd.f32 %v674, %v778
    %v784 = vadd.f32 %v675, %v781
    %s785 = scalar_lea.vmem %s9, 4
    %v786 = vld [vmem:[%s785] sm:$0x1]
    %s787 = scalar_lea.vmem %s9, 5
    %v788 = vld [vmem:[%s787] sm:$0x1]
    %v789 = vsel %vm108, %v783, 0.0
    %790 = vadd.xlane.f32.xlu0 %v789
    %v791 = vpop.xlane.xlu0 %790
    %v792 = vsel %vm108, %v784, 0.0
    %793 = vadd.xlane.f32.xlu0 %v792
    %v794 = vpop.xlane.xlu0 %793
    %v795 = vmul.f32 %v791, %v121
    %v796 = vmul.f32 %v794, %v121
    %v797 = vsub.f32 %v783, %v795
    %v798 = vsub.f32 %v784, %v796
    %v799 = vmul.f32 %v797, %v797
    %v800 = vmul.f32 %v798, %v798
    %v801 = vsel %vm108, %v799, 0.0
    %802 = vadd.xlane.f32.xlu0 %v801
    %v803 = vpop.xlane.xlu0 %802
    %v804 = vsel %vm108, %v800, 0.0
    %805 = vadd.xlane.f32.xlu0 %v804
    %v806 = vpop.xlane.xlu0 %805
    %v807 = vmul.f32 %v803, %v121
    %v808 = vmul.f32 %v806, %v121
    %v809 = vadd.f32 %v807, 1e-12
    %v810 = vadd.f32 %v808, 1e-12
    %v811 = vrsqrt.pop %v809
    %v812 = vmul.f32 %v811, %v809
    %v813 = vmul.f32 %v812, %v811
    %v814 = vmul.f32 0.5, %v813
    %v815 = vsub.f32 1.5, %v814
    %v816 = vmul.f32 %v811, %v815
    %vm817 = vweird.f32 %v809
    %vm818 = vweird.f32 %v811
    %vm819 = vmor %vm817, %vm818
    %v820 = vsel %vm819, %v811, %v816
    %v821 = vrsqrt.pop %v810
    %v822 = vmul.f32 %v821, %v810
    %v823 = vmul.f32 %v822, %v821
    %v824 = vmul.f32 0.5, %v823
    %v825 = vsub.f32 1.5, %v824
    %v826 = vmul.f32 %v821, %v825
    %vm827 = vweird.f32 %v810
    %vm828 = vweird.f32 %v821
    %vm829 = vmor %vm827, %vm828
    %v830 = vsel %vm829, %v821, %v826
    %v831 = vmul.f32 %v797, %v820
    %v832 = vmul.f32 %v798, %v830
    %v834 = vperm.slane %v786, 0
    %v836 = vmul.f32 %v831, %v834
    %v837 = vmul.f32 %v832, %v834
    %v839 = vperm.slane %v788, 0
    %v841 = vadd.f32 %v836, %v839
    %v842 = vadd.f32 %v837, %v839
    %s843 = scalar_lea.vmem %s4, 192
    %v844 = vld [vmem:[%s843] sm:$0xff]
    %v845 = vld [vmem:[%s843 + $0x8] sm:$0xff]
    %v846 = vld [vmem:[%s843 + $0x10] sm:$0xff]
    %v847 = vld [vmem:[%s843 + $0x18] sm:$0xff]
    %s848 = scalar_lea.vmem %s5, 6
    %v849 = vld [vmem:[%s848] sm:$0x1]
    %v851 = vperm.slane %v849, 0
    %v854 = vsel %vm108, %v841, 0
    %v857 = vsel %vm108, %v842, 0
    %859 = vmatpush.msra.mxu0 0.0
    %860 = vmatpush.msra.mxu0 0.0
    %861 = vmatpush.msra.mxu0 0.0
    %862 = vmatpush.msra.mxu0 0.0
    %863 = vmatpush.msra.mxu0 0.0
    %864 = vmatpush.msra.mxu0 0.0
    %865 = vmatpush.msra.mxu0 0.0
    %866 = vmatpush.msra.mxu0 0.0
    %867 = vmatpush.msra.mxu0 0.0
    %868 = vmatpush.msra.mxu0 0.0
    %869 = vmatpush.msra.mxu0 0.0
    %870 = vmatpush.msra.mxu0 0.0
    %871 = vmatpush.msra.mxu0 %v847
    %872 = vmatpush.msra.mxu0 %v846
    %873 = vmatpush.msra.mxu0 %v845
    %874 = vmatpush.msra.mxu0 %v844
    %875 = vmatmul.f32.gmra.mxu0 %v854
    %v876 = vpop.f32.mrf.mxu0
    %v877 = vadd.f32 %v851, %v876
    %878 = vmatmul.f32.gmra.mxu0 %v857
    %v879 = vpop.f32.mrf.mxu0
    %v880 = vadd.f32 %v851, %v879
    %881 = vdwg.mxu0
    %s882 = scalar_lea.vmem %s4, 256
    %v883 = vld [vmem:[%s882] sm:$0xff]
    %v884 = vld [vmem:[%s882 + $0x8] sm:$0xff]
    %v885 = vld [vmem:[%s882 + $0x10] sm:$0xff]
    %v886 = vld [vmem:[%s882 + $0x18] sm:$0xff]
    %s887 = scalar_lea.vmem %s5, 8
    %v888 = vld [vmem:[%s887] sm:$0x1]
    %v890 = vperm.slane %v888, 0
    %892 = vmatpush.msra.mxu0 0.0
    %893 = vmatpush.msra.mxu0 0.0
    %894 = vmatpush.msra.mxu0 0.0
    %895 = vmatpush.msra.mxu0 0.0
    %896 = vmatpush.msra.mxu0 0.0
    %897 = vmatpush.msra.mxu0 0.0
    %898 = vmatpush.msra.mxu0 0.0
    %899 = vmatpush.msra.mxu0 0.0
    %900 = vmatpush.msra.mxu0 0.0
    %901 = vmatpush.msra.mxu0 0.0
    %902 = vmatpush.msra.mxu0 0.0
    %903 = vmatpush.msra.mxu0 0.0
    %904 = vmatpush.msra.mxu0 %v886
    %905 = vmatpush.msra.mxu0 %v885
    %906 = vmatpush.msra.mxu0 %v884
    %907 = vmatpush.msra.mxu0 %v883
    %908 = vmatmul.f32.gmra.mxu0 %v854
    %v909 = vpop.f32.mrf.mxu0
    %v910 = vadd.f32 %v890, %v909
    %911 = vmatmul.f32.gmra.mxu0 %v857
    %v912 = vpop.f32.mrf.mxu0
    %v913 = vadd.f32 %v890, %v912
    %914 = vdwg.mxu0
    %s915 = scalar_lea.vmem %s4, 320
    %v916 = vld [vmem:[%s915] sm:$0xff]
    %v917 = vld [vmem:[%s915 + $0x8] sm:$0xff]
    %v918 = vld [vmem:[%s915 + $0x10] sm:$0xff]
    %v919 = vld [vmem:[%s915 + $0x18] sm:$0xff]
    %s920 = scalar_lea.vmem %s5, 10
    %v921 = vld [vmem:[%s920] sm:$0x1]
    %v923 = vperm.slane %v921, 0
    %925 = vmatpush.msra.mxu0 0.0
    %926 = vmatpush.msra.mxu0 0.0
    %927 = vmatpush.msra.mxu0 0.0
    %928 = vmatpush.msra.mxu0 0.0
    %929 = vmatpush.msra.mxu0 0.0
    %930 = vmatpush.msra.mxu0 0.0
    %931 = vmatpush.msra.mxu0 0.0
    %932 = vmatpush.msra.mxu0 0.0
    %933 = vmatpush.msra.mxu0 0.0
    %934 = vmatpush.msra.mxu0 0.0
    %935 = vmatpush.msra.mxu0 0.0
    %936 = vmatpush.msra.mxu0 0.0
    %937 = vmatpush.msra.mxu0 %v919
    %938 = vmatpush.msra.mxu0 %v918
    %939 = vmatpush.msra.mxu0 %v917
    %940 = vmatpush.msra.mxu0 %v916
    %941 = vmatmul.f32.gmra.mxu0 %v854
    %v942 = vpop.f32.mrf.mxu0
    %v943 = vadd.f32 %v923, %v942
    %944 = vmatmul.f32.gmra.mxu0 %v857
    %v945 = vpop.f32.mrf.mxu0
    %v946 = vadd.f32 %v923, %v945
    %947 = vdwg.mxu0
    %v949 = vsel %vm275, %v877, 0
    %v952 = vsel %vm275, %v880, 0
    %v955 = vsel %vm275, %v910, 0
    %v958 = vsel %vm275, %v913, 0
    %960 = vmatpush.xpose.msra.mxu0 0.0
    %961 = vmatpush.xpose.msra.mxu0 0.0
    %962 = vmatpush.xpose.msra.mxu0 0.0
    %963 = vmatpush.xpose.msra.mxu0 0.0
    %964 = vmatpush.xpose.msra.mxu0 0.0
    %965 = vmatpush.xpose.msra.mxu0 0.0
    %966 = vmatpush.xpose.msra.mxu0 0.0
    %967 = vmatpush.xpose.msra.mxu0 0.0
    %968 = vmatpush.xpose.msra.mxu0 0.0
    %969 = vmatpush.xpose.msra.mxu0 0.0
    %970 = vmatpush.xpose.msra.mxu0 0.0
    %971 = vmatpush.xpose.msra.mxu0 0.0
    %972 = vmatpush.xpose.msra.mxu0 0.0
    %973 = vmatpush.xpose.msra.mxu0 0.0
    %974 = vmatpush.xpose.msra.mxu0 %v958
    %975 = vmatpush.xpose.msra.mxu0 %v955
    %976 = vmatmul.f32.gmra.mxu0 %v949
    %v977 = vpop.f32.mrf.mxu0
    %v978 = vadd.f32 %v170, %v977
    %979 = vmatmul.f32.gmra.mxu0 %v952
    %v980 = vpop.f32.mrf.mxu0
    %v981 = vadd.f32 %v171, %v980
    %982 = vdwg.mxu0
    %v983 = vsel %vm275, %v978, -inf
    %984 = vmax.xlane.f32.xlu0 %v983
    %v985 = vpop.xlane.xlu0 %984
    %v986 = vsel %vm275, %v981, -inf
    %987 = vmax.xlane.f32.xlu0 %v986
    %v988 = vpop.xlane.xlu0 %987
    %v989 = vsub.f32 %v978, %v985
    %v990 = vsub.f32 %v981, %v988
    %v991 = vmul.f32 %v989, 1.442695
    %v992 = vpow.pop %v991
    %v993 = vmul.f32 %v990, 1.442695
    %v994 = vpow.pop %v993
    %v995 = vsel %vm275, %v992, 0.0
    %996 = vadd.xlane.f32.xlu0 %v995
    %v997 = vpop.xlane.xlu0 %996
    %v998 = vsel %vm275, %v994, 0.0
    %999 = vadd.xlane.f32.xlu0 %v998
    %v1000 = vpop.xlane.xlu0 %999
    %v1001 = vrcp.pop %v997
    %v1002 = vrcp.pop %v1000
    %v1003 = vmul.f32 %v992, %v1001
    %v1004 = vmul.f32 %v994, %v1002
    %v1006 = vsel %vm275, %v1003, 0
    %v1009 = vsel %vm275, %v1004, 0
    %1011 = vmatpush.msra.mxu0 0.0
    %1012 = vmatpush.msra.mxu0 0.0
    %1013 = vmatpush.msra.mxu0 0.0
    %1014 = vmatpush.msra.mxu0 0.0
    %1015 = vmatpush.msra.mxu0 0.0
    %1016 = vmatpush.msra.mxu0 0.0
    %1017 = vmatpush.msra.mxu0 0.0
    %1018 = vmatpush.msra.mxu0 0.0
    %1019 = vmatpush.msra.mxu0 0.0
    %1020 = vmatpush.msra.mxu0 0.0
    %1021 = vmatpush.msra.mxu0 0.0
    %1022 = vmatpush.msra.mxu0 0.0
    %1023 = vmatpush.msra.mxu0 0.0
    %1024 = vmatpush.msra.mxu0 0.0
    %1025 = vmatpush.msra.mxu0 %v946
    %1026 = vmatpush.msra.mxu0 %v943
    %1027 = vmatmul.f32.gmra.mxu0 %v1006
    %v1028 = vpop.f32.mrf.mxu0
    %v1029 = vadd.f32 0.0, %v1028
    %1030 = vmatmul.f32.gmra.mxu0 %v1009
    %v1031 = vpop.f32.mrf.mxu0
    %v1032 = vadd.f32 0.0, %v1031
    %1033 = vdwg.mxu0
    %s1034 = scalar_lea.vmem %s6, 32
    %v1035 = vld [vmem:[%s1034] sm:$0xff]
    %v1036 = vld [vmem:[%s1034 + $0x8] sm:$0xff]
    %s1037 = scalar_lea.vmem %s4, 224
    %v1038 = vld [vmem:[%s1037] sm:$0xff]
    %v1039 = vld [vmem:[%s1037 + $0x8] sm:$0xff]
    %v1040 = vld [vmem:[%s1037 + $0x10] sm:$0xff]
    %v1041 = vld [vmem:[%s1037 + $0x18] sm:$0xff]
    %s1042 = scalar_lea.vmem %s5, 7
    %v1043 = vld [vmem:[%s1042] sm:$0x1]
    %v1045 = vperm.slane %v1043, 0
    %1047 = vmatpush.msra.mxu0 0.0
    %1048 = vmatpush.msra.mxu0 0.0
    %1049 = vmatpush.msra.mxu0 0.0
    %1050 = vmatpush.msra.mxu0 0.0
    %1051 = vmatpush.msra.mxu0 0.0
    %1052 = vmatpush.msra.mxu0 0.0
    %1053 = vmatpush.msra.mxu0 0.0
    %1054 = vmatpush.msra.mxu0 0.0
    %1055 = vmatpush.msra.mxu0 0.0
    %1056 = vmatpush.msra.mxu0 0.0
    %1057 = vmatpush.msra.mxu0 0.0
    %1058 = vmatpush.msra.mxu0 0.0
    %1059 = vmatpush.msra.mxu0 %v1041
    %1060 = vmatpush.msra.mxu0 %v1040
    %1061 = vmatpush.msra.mxu0 %v1039
    %1062 = vmatpush.msra.mxu0 %v1038
    %1063 = vmatmul.f32.gmra.mxu0 %v854
    %v1064 = vpop.f32.mrf.mxu0
    %v1065 = vadd.f32 %v1045, %v1064
    %1066 = vmatmul.f32.gmra.mxu0 %v857
    %v1067 = vpop.f32.mrf.mxu0
    %v1068 = vadd.f32 %v1045, %v1067
    %1069 = vdwg.mxu0
    %s1070 = scalar_lea.vmem %s4, 288
    %v1071 = vld [vmem:[%s1070] sm:$0xff]
    %v1072 = vld [vmem:[%s1070 + $0x8] sm:$0xff]
    %v1073 = vld [vmem:[%s1070 + $0x10] sm:$0xff]
    %v1074 = vld [vmem:[%s1070 + $0x18] sm:$0xff]
    %s1075 = scalar_lea.vmem %s5, 9
    %v1076 = vld [vmem:[%s1075] sm:$0x1]
    %v1078 = vperm.slane %v1076, 0
    %1080 = vmatpush.msra.mxu0 0.0
    %1081 = vmatpush.msra.mxu0 0.0
    %1082 = vmatpush.msra.mxu0 0.0
    %1083 = vmatpush.msra.mxu0 0.0
    %1084 = vmatpush.msra.mxu0 0.0
    %1085 = vmatpush.msra.mxu0 0.0
    %1086 = vmatpush.msra.mxu0 0.0
    %1087 = vmatpush.msra.mxu0 0.0
    %1088 = vmatpush.msra.mxu0 0.0
    %1089 = vmatpush.msra.mxu0 0.0
    %1090 = vmatpush.msra.mxu0 0.0
    %1091 = vmatpush.msra.mxu0 0.0
    %1092 = vmatpush.msra.mxu0 %v1074
    %1093 = vmatpush.msra.mxu0 %v1073
    %1094 = vmatpush.msra.mxu0 %v1072
    %1095 = vmatpush.msra.mxu0 %v1071
    %1096 = vmatmul.f32.gmra.mxu0 %v854
    %v1097 = vpop.f32.mrf.mxu0
    %v1098 = vadd.f32 %v1078, %v1097
    %1099 = vmatmul.f32.gmra.mxu0 %v857
    %v1100 = vpop.f32.mrf.mxu0
    %v1101 = vadd.f32 %v1078, %v1100
    %1102 = vdwg.mxu0
    %s1103 = scalar_lea.vmem %s4, 352
    %v1104 = vld [vmem:[%s1103] sm:$0xff]
    %v1105 = vld [vmem:[%s1103 + $0x8] sm:$0xff]
    %v1106 = vld [vmem:[%s1103 + $0x10] sm:$0xff]
    %v1107 = vld [vmem:[%s1103 + $0x18] sm:$0xff]
    %s1108 = scalar_lea.vmem %s5, 11
    %v1109 = vld [vmem:[%s1108] sm:$0x1]
    %v1111 = vperm.slane %v1109, 0
    %1113 = vmatpush.msra.mxu0 0.0
    %1114 = vmatpush.msra.mxu0 0.0
    %1115 = vmatpush.msra.mxu0 0.0
    %1116 = vmatpush.msra.mxu0 0.0
    %1117 = vmatpush.msra.mxu0 0.0
    %1118 = vmatpush.msra.mxu0 0.0
    %1119 = vmatpush.msra.mxu0 0.0
    %1120 = vmatpush.msra.mxu0 0.0
    %1121 = vmatpush.msra.mxu0 0.0
    %1122 = vmatpush.msra.mxu0 0.0
    %1123 = vmatpush.msra.mxu0 0.0
    %1124 = vmatpush.msra.mxu0 0.0
    %1125 = vmatpush.msra.mxu0 %v1107
    %1126 = vmatpush.msra.mxu0 %v1106
    %1127 = vmatpush.msra.mxu0 %v1105
    %1128 = vmatpush.msra.mxu0 %v1104
    %1129 = vmatmul.f32.gmra.mxu0 %v854
    %v1130 = vpop.f32.mrf.mxu0
    %v1131 = vadd.f32 %v1111, %v1130
    %1132 = vmatmul.f32.gmra.mxu0 %v857
    %v1133 = vpop.f32.mrf.mxu0
    %v1134 = vadd.f32 %v1111, %v1133
    %1135 = vdwg.mxu0
    %v1137 = vsel %vm275, %v1065, 0
    %v1140 = vsel %vm275, %v1068, 0
    %v1143 = vsel %vm275, %v1098, 0
    %v1146 = vsel %vm275, %v1101, 0
    %1148 = vmatpush.xpose.msra.mxu0 0.0
    %1149 = vmatpush.xpose.msra.mxu0 0.0
    %1150 = vmatpush.xpose.msra.mxu0 0.0
    %1151 = vmatpush.xpose.msra.mxu0 0.0
    %1152 = vmatpush.xpose.msra.mxu0 0.0
    %1153 = vmatpush.xpose.msra.mxu0 0.0
    %1154 = vmatpush.xpose.msra.mxu0 0.0
    %1155 = vmatpush.xpose.msra.mxu0 0.0
    %1156 = vmatpush.xpose.msra.mxu0 0.0
    %1157 = vmatpush.xpose.msra.mxu0 0.0
    %1158 = vmatpush.xpose.msra.mxu0 0.0
    %1159 = vmatpush.xpose.msra.mxu0 0.0
    %1160 = vmatpush.xpose.msra.mxu0 0.0
    %1161 = vmatpush.xpose.msra.mxu0 0.0
    %1162 = vmatpush.xpose.msra.mxu0 %v1146
    %1163 = vmatpush.xpose.msra.mxu0 %v1143
    %1164 = vmatmul.f32.gmra.mxu0 %v1137
    %v1165 = vpop.f32.mrf.mxu0
    %v1166 = vadd.f32 %v170, %v1165
    %1167 = vmatmul.f32.gmra.mxu0 %v1140
    %v1168 = vpop.f32.mrf.mxu0
    %v1169 = vadd.f32 %v171, %v1168
    %1170 = vdwg.mxu0
    %v1171 = vsel %vm275, %v1166, -inf
    %1172 = vmax.xlane.f32.xlu0 %v1171
    %v1173 = vpop.xlane.xlu0 %1172
    %v1174 = vsel %vm275, %v1169, -inf
    %1175 = vmax.xlane.f32.xlu0 %v1174
    %v1176 = vpop.xlane.xlu0 %1175
    %v1177 = vsub.f32 %v1166, %v1173
    %v1178 = vsub.f32 %v1169, %v1176
    %v1179 = vmul.f32 %v1177, 1.442695
    %v1180 = vpow.pop %v1179
    %v1181 = vmul.f32 %v1178, 1.442695
    %v1182 = vpow.pop %v1181
    %v1183 = vsel %vm275, %v1180, 0.0
    %1184 = vadd.xlane.f32.xlu0 %v1183
    %v1185 = vpop.xlane.xlu0 %1184
    %v1186 = vsel %vm275, %v1182, 0.0
    %1187 = vadd.xlane.f32.xlu0 %v1186
    %v1188 = vpop.xlane.xlu0 %1187
    %v1189 = vrcp.pop %v1185
    %v1190 = vrcp.pop %v1188
    %v1191 = vmul.f32 %v1180, %v1189
    %v1192 = vmul.f32 %v1182, %v1190
    %v1194 = vsel %vm275, %v1191, 0
    %v1197 = vsel %vm275, %v1192, 0
    %1199 = vmatpush.msra.mxu0 0.0
    %1200 = vmatpush.msra.mxu0 0.0
    %1201 = vmatpush.msra.mxu0 0.0
    %1202 = vmatpush.msra.mxu0 0.0
    %1203 = vmatpush.msra.mxu0 0.0
    %1204 = vmatpush.msra.mxu0 0.0
    %1205 = vmatpush.msra.mxu0 0.0
    %1206 = vmatpush.msra.mxu0 0.0
    %1207 = vmatpush.msra.mxu0 0.0
    %1208 = vmatpush.msra.mxu0 0.0
    %1209 = vmatpush.msra.mxu0 0.0
    %1210 = vmatpush.msra.mxu0 0.0
    %1211 = vmatpush.msra.mxu0 0.0
    %1212 = vmatpush.msra.mxu0 0.0
    %1213 = vmatpush.msra.mxu0 %v1134
    %1214 = vmatpush.msra.mxu0 %v1131
    %1215 = vmatmul.f32.gmra.mxu0 %v1194
    %v1216 = vpop.f32.mrf.mxu0
    %v1217 = vadd.f32 0.0, %v1216
    %1218 = vmatmul.f32.gmra.mxu0 %v1197
    %v1219 = vpop.f32.mrf.mxu0
    %v1220 = vadd.f32 0.0, %v1219
    %1221 = vdwg.mxu0
    %s1222 = scalar_lea.vmem %s6, 48
    %v1223 = vld [vmem:[%s1222] sm:$0xff]
    %v1224 = vld [vmem:[%s1222 + $0x8] sm:$0xff]
    %v1226 = vsel %vm275, %v1217, 0
    %v1229 = vsel %vm275, %v1220, 0
    %1231 = vmatpush.msra.mxu0 0.0
    %1232 = vmatpush.msra.mxu0 0.0
    %1233 = vmatpush.msra.mxu0 0.0
    %1234 = vmatpush.msra.mxu0 0.0
    %1235 = vmatpush.msra.mxu0 0.0
    %1236 = vmatpush.msra.mxu0 0.0
    %1237 = vmatpush.msra.mxu0 0.0
    %1238 = vmatpush.msra.mxu0 0.0
    %1239 = vmatpush.msra.mxu0 0.0
    %1240 = vmatpush.msra.mxu0 0.0
    %1241 = vmatpush.msra.mxu0 0.0
    %1242 = vmatpush.msra.mxu0 0.0
    %1243 = vmatpush.msra.mxu0 0.0
    %1244 = vmatpush.msra.mxu0 0.0
    %1245 = vmatpush.msra.mxu0 %v1224
    %1246 = vmatpush.msra.mxu0 %v1223
    %1247 = vmatmul.f32.gmra.mxu0 %v1226
    %v1248 = vpop.f32.mrf.mxu0
    %v1249 = vadd.f32 0.0, %v1248
    %1250 = vmatmul.f32.gmra.mxu0 %v1229
    %v1251 = vpop.f32.mrf.mxu0
    %v1252 = vadd.f32 0.0, %v1251
    %1253 = vdwg.mxu0
    %v1255 = vsel %vm275, %v1029, 0
    %v1258 = vsel %vm275, %v1032, 0
    %1260 = vmatpush.msra.mxu0 0.0
    %1261 = vmatpush.msra.mxu0 0.0
    %1262 = vmatpush.msra.mxu0 0.0
    %1263 = vmatpush.msra.mxu0 0.0
    %1264 = vmatpush.msra.mxu0 0.0
    %1265 = vmatpush.msra.mxu0 0.0
    %1266 = vmatpush.msra.mxu0 0.0
    %1267 = vmatpush.msra.mxu0 0.0
    %1268 = vmatpush.msra.mxu0 0.0
    %1269 = vmatpush.msra.mxu0 0.0
    %1270 = vmatpush.msra.mxu0 0.0
    %1271 = vmatpush.msra.mxu0 0.0
    %1272 = vmatpush.msra.mxu0 0.0
    %1273 = vmatpush.msra.mxu0 0.0
    %1274 = vmatpush.msra.mxu0 %v1036
    %1275 = vmatpush.msra.mxu0 %v1035
    %1276 = vmatmul.f32.gmra.mxu0 %v1255
    %v1277 = vpop.f32.mrf.mxu0
    %v1278 = vadd.f32 %v1249, %v1277
    %1279 = vmatmul.f32.gmra.mxu0 %v1258
    %v1280 = vpop.f32.mrf.mxu0
    %v1281 = vadd.f32 %v1252, %v1280
    %1282 = vdwg.mxu0
    %s1283 = scalar_lea.vmem %s9, 6
    %v1284 = vld [vmem:[%s1283] sm:$0x1]
    %v1286 = vperm.slane %v1284, 0
    %v1288 = vadd.f32 %v1278, %v1286
    %v1289 = vadd.f32 %v1281, %v1286
    %v1290 = vadd.f32 %v841, %v1288
    %v1291 = vadd.f32 %v842, %v1289
    %s1292 = scalar_lea.vmem %s9, 7
    %v1293 = vld [vmem:[%s1292] sm:$0x1]
    %s1294 = scalar_lea.vmem %s9, 8
    %v1295 = vld [vmem:[%s1294] sm:$0x1]
    %v1296 = vsel %vm108, %v1290, 0.0
    %1297 = vadd.xlane.f32.xlu0 %v1296
    %v1298 = vpop.xlane.xlu0 %1297
    %v1299 = vsel %vm108, %v1291, 0.0
    %1300 = vadd.xlane.f32.xlu0 %v1299
    %v1301 = vpop.xlane.xlu0 %1300
    %v1302 = vmul.f32 %v1298, %v121
    %v1303 = vmul.f32 %v1301, %v121
    %v1304 = vsub.f32 %v1290, %v1302
    %v1305 = vsub.f32 %v1291, %v1303
    %v1306 = vmul.f32 %v1304, %v1304
    %v1307 = vmul.f32 %v1305, %v1305
    %v1308 = vsel %vm108, %v1306, 0.0
    %1309 = vadd.xlane.f32.xlu0 %v1308
    %v1310 = vpop.xlane.xlu0 %1309
    %v1311 = vsel %vm108, %v1307, 0.0
    %1312 = vadd.xlane.f32.xlu0 %v1311
    %v1313 = vpop.xlane.xlu0 %1312
    %v1314 = vmul.f32 %v1310, %v121
    %v1315 = vmul.f32 %v1313, %v121
    %v1316 = vadd.f32 %v1314, 1e-12
    %v1317 = vadd.f32 %v1315, 1e-12
    %v1318 = vrsqrt.pop %v1316
    %v1319 = vmul.f32 %v1318, %v1316
    %v1320 = vmul.f32 %v1319, %v1318
    %v1321 = vmul.f32 0.5, %v1320
    %v1322 = vsub.f32 1.5, %v1321
    %v1323 = vmul.f32 %v1318, %v1322
    %vm1324 = vweird.f32 %v1316
    %vm1325 = vweird.f32 %v1318
    %vm1326 = vmor %vm1324, %vm1325
    %v1327 = vsel %vm1326, %v1318, %v1323
    %v1328 = vrsqrt.pop %v1317
    %v1329 = vmul.f32 %v1328, %v1317
    %v1330 = vmul.f32 %v1329, %v1328
    %v1331 = vmul.f32 0.5, %v1330
    %v1332 = vsub.f32 1.5, %v1331
    %v1333 = vmul.f32 %v1328, %v1332
    %vm1334 = vweird.f32 %v1317
    %vm1335 = vweird.f32 %v1328
    %vm1336 = vmor %vm1334, %vm1335
    %v1337 = vsel %vm1336, %v1328, %v1333
    %v1338 = vmul.f32 %v1304, %v1327
    %v1339 = vmul.f32 %v1305, %v1337
    %v1341 = vperm.slane %v1293, 0
    %v1343 = vmul.f32 %v1338, %v1341
    %v1344 = vmul.f32 %v1339, %v1341
    %v1346 = vperm.slane %v1295, 0
    %v1348 = vadd.f32 %v1343, %v1346
    %v1349 = vadd.f32 %v1344, %v1346
    %s1350 = scalar_lea.vmem %s7, 64
    %v1351 = vld [vmem:[%s1350] sm:$0xff]
    %v1352 = vld [vmem:[%s1350 + $0x8] sm:$0xff]
    %v1353 = vld [vmem:[%s1350 + $0x10] sm:$0xff]
    %v1354 = vld [vmem:[%s1350 + $0x18] sm:$0xff]
    %s1355 = scalar_lea.vmem %s8, 1
    %v1356 = vld [vmem:[%s1355] sm:$0x1]
    %v1358 = vperm.slane %v1356, 0
    %v1361 = vsel %vm108, %v1348, 0
    %v1364 = vsel %vm108, %v1349, 0
    %1366 = vmatpush.msra.mxu0 0.0
    %1367 = vmatpush.msra.mxu0 0.0
    %1368 = vmatpush.msra.mxu0 0.0
    %1369 = vmatpush.msra.mxu0 0.0
    %1370 = vmatpush.msra.mxu0 0.0
    %1371 = vmatpush.msra.mxu0 0.0
    %1372 = vmatpush.msra.mxu0 0.0
    %1373 = vmatpush.msra.mxu0 0.0
    %1374 = vmatpush.msra.mxu0 0.0
    %1375 = vmatpush.msra.mxu0 0.0
    %1376 = vmatpush.msra.mxu0 0.0
    %1377 = vmatpush.msra.mxu0 0.0
    %1378 = vmatpush.msra.mxu0 %v1354
    %1379 = vmatpush.msra.mxu0 %v1353
    %1380 = vmatpush.msra.mxu0 %v1352
    %1381 = vmatpush.msra.mxu0 %v1351
    %1382 = vmatmul.f32.gmra.mxu0 %v1361
    %v1383 = vpop.f32.mrf.mxu0
    %v1384 = vadd.f32 %v1358, %v1383
    %1385 = vmatmul.f32.gmra.mxu0 %v1364
    %v1386 = vpop.f32.mrf.mxu0
    %v1387 = vadd.f32 %v1358, %v1386
    %1388 = vdwg.mxu0
    %v1389 = vmul.f32 %v1384, 0.5
    %v1390 = vmul.f32 %v1387, 0.5
    %v1391 = vmul.f32 %v1384, 0.044715
    %v1392 = vmul.f32 %v1387, 0.044715
    %v1393 = vmul.f32 %v1391, %v1384
    %v1394 = vmul.f32 %v1392, %v1387
    %v1395 = vmul.f32 %v1393, %v1384
    %v1396 = vmul.f32 %v1394, %v1387
    %v1397 = vadd.f32 %v1384, %v1395
    %v1398 = vadd.f32 %v1387, %v1396
    %v1399 = vmul.f32 %v1397, 0.7978846
    %v1400 = vmul.f32 %v1398, 0.7978846
    %v1401 = vtanh.pop %v1399
    %v1402 = vtanh.pop %v1400
    %v1403 = vadd.f32 %v1401, 1.0
    %v1404 = vadd.f32 %v1402, 1.0
    %v1405 = vmul.f32 %v1389, %v1403
    %v1406 = vmul.f32 %v1390, %v1404
    %s1407 = scalar_lea.vmem %s7, 96
    %v1408 = vld [vmem:[%s1407] sm:$0xff]
    %v1409 = vld [vmem:[%s1407 + $0x8] sm:$0xff]
    %v1410 = vld [vmem:[%s1407 + $0x10] sm:$0xff]
    %v1411 = vld [vmem:[%s1407 + $0x18] sm:$0xff]
    %s1412 = scalar_lea.vmem %s9, 9
    %v1413 = vld [vmem:[%s1412] sm:$0x1]
    %v1415 = vperm.slane %v1413, 0
    %v1418 = vsel %vm741, %v1405, 0
    %v1421 = vsel %vm741, %v1406, 0
    %v1424 = vsel %vm741, %v1408, 0
    %v1427 = vsel %vm741, %v1409, 0
    %v1430 = vsel %vm741, %v1410, 0
    %v1433 = vsel %vm741, %v1411, 0
    %1435 = vmatpush.xpose.msra.mxu0 0.0
    %1436 = vmatpush.xpose.msra.mxu0 0.0
    %1437 = vmatpush.xpose.msra.mxu0 0.0
    %1438 = vmatpush.xpose.msra.mxu0 0.0
    %1439 = vmatpush.xpose.msra.mxu0 0.0
    %1440 = vmatpush.xpose.msra.mxu0 0.0
    %1441 = vmatpush.xpose.msra.mxu0 0.0
    %1442 = vmatpush.xpose.msra.mxu0 0.0
    %1443 = vmatpush.xpose.msra.mxu0 0.0
    %1444 = vmatpush.xpose.msra.mxu0 0.0
    %1445 = vmatpush.xpose.msra.mxu0 0.0
    %1446 = vmatpush.xpose.msra.mxu0 0.0
    %1447 = vmatpush.xpose.msra.mxu0 %v1433
    %1448 = vmatpush.xpose.msra.mxu0 %v1430
    %1449 = vmatpush.xpose.msra.mxu0 %v1427
    %1450 = vmatpush.xpose.msra.mxu0 %v1424
    %1451 = vmatmul.f32.gmra.mxu0 %v1418
    %v1452 = vpop.f32.mrf.mxu0
    %v1453 = vadd.f32 %v1415, %v1452
    %1454 = vmatmul.f32.gmra.mxu0 %v1421
    %v1455 = vpop.f32.mrf.mxu0
    %v1456 = vadd.f32 %v1415, %v1455
    %1457 = vdwg.mxu0
    %v1458 = vadd.f32 %v1348, %v1453
    %v1459 = vadd.f32 %v1349, %v1456
    %s1460 = scalar_lea.vmem %s9, 10
    %v1461 = vld [vmem:[%s1460] sm:$0x1]
    %s1462 = scalar_lea.vmem %s9, 11
    %v1463 = vld [vmem:[%s1462] sm:$0x1]
    %v1464 = vsel %vm108, %v1458, 0.0
    %1465 = vadd.xlane.f32.xlu0 %v1464
    %v1466 = vpop.xlane.xlu0 %1465
    %v1467 = vsel %vm108, %v1459, 0.0
    %1468 = vadd.xlane.f32.xlu0 %v1467
    %v1469 = vpop.xlane.xlu0 %1468
    %v1470 = vmul.f32 %v1466, %v121
    %v1471 = vmul.f32 %v1469, %v121
    %v1472 = vsub.f32 %v1458, %v1470
    %v1473 = vsub.f32 %v1459, %v1471
    %v1474 = vmul.f32 %v1472, %v1472
    %v1475 = vmul.f32 %v1473, %v1473
    %v1476 = vsel %vm108, %v1474, 0.0
    %1477 = vadd.xlane.f32.xlu0 %v1476
    %v1478 = vpop.xlane.xlu0 %1477
    %v1479 = vsel %vm108, %v1475, 0.0
    %1480 = vadd.xlane.f32.xlu0 %v1479
    %v1481 = vpop.xlane.xlu0 %1480
    %v1482 = vmul.f32 %v1478, %v121
    %v1483 = vmul.f32 %v1481, %v121
    %v1484 = vadd.f32 %v1482, 1e-12
    %v1485 = vadd.f32 %v1483, 1e-12
    %v1486 = vrsqrt.pop %v1484
    %v1487 = vmul.f32 %v1486, %v1484
    %v1488 = vmul.f32 %v1487, %v1486
    %v1489 = vmul.f32 0.5, %v1488
    %v1490 = vsub.f32 1.5, %v1489
    %v1491 = vmul.f32 %v1486, %v1490
    %vm1492 = vweird.f32 %v1484
    %vm1493 = vweird.f32 %v1486
    %vm1494 = vmor %vm1492, %vm1493
    %v1495 = vsel %vm1494, %v1486, %v1491
    %v1496 = vrsqrt.pop %v1485
    %v1497 = vmul.f32 %v1496, %v1485
    %v1498 = vmul.f32 %v1497, %v1496
    %v1499 = vmul.f32 0.5, %v1498
    %v1500 = vsub.f32 1.5, %v1499
    %v1501 = vmul.f32 %v1496, %v1500
    %vm1502 = vweird.f32 %v1485
    %vm1503 = vweird.f32 %v1496
    %vm1504 = vmor %vm1502, %vm1503
    %v1505 = vsel %vm1504, %v1496, %v1501
    %v1506 = vmul.f32 %v1472, %v1495
    %v1507 = vmul.f32 %v1473, %v1505
    %v1509 = vperm.slane %v1461, 0
    %v1511 = vmul.f32 %v1506, %v1509
    %v1512 = vmul.f32 %v1507, %v1509
    %v1514 = vperm.slane %v1463, 0
    %v1516 = vadd.f32 %v1511, %v1514
    %v1517 = vadd.f32 %v1512, %v1514
    %v1518 = vlaneseq
    %v1519 = vshrl.u32 %v1518, 7
    %v1520 = vmul.u32 %v1519, 8
    %vm1521 = vcmp.eq.s32.totalorder %v51, %v1520
    %v1522 = vsel %vm1521, 1, 0
    %v1523 = vcvt.s32.f32 %v1522
    %v1525 = vsel %vm275, %v1523, 0
    %1527 = vmatpush.msra.mxu0 0.0
    %1528 = vmatpush.msra.mxu0 0.0
    %1529 = vmatpush.msra.mxu0 0.0
    %1530 = vmatpush.msra.mxu0 0.0
    %1531 = vmatpush.msra.mxu0 0.0
    %1532 = vmatpush.msra.mxu0 0.0
    %1533 = vmatpush.msra.mxu0 0.0
    %1534 = vmatpush.msra.mxu0 0.0
    %1535 = vmatpush.msra.mxu0 0.0
    %1536 = vmatpush.msra.mxu0 0.0
    %1537 = vmatpush.msra.mxu0 0.0
    %1538 = vmatpush.msra.mxu0 0.0
    %1539 = vmatpush.msra.mxu0 0.0
    %1540 = vmatpush.msra.mxu0 0.0
    %1541 = vmatpush.msra.mxu0 %v1517
    %1542 = vmatpush.msra.mxu0 %v1516
    %1543 = vmatmul.f32.gmra.mxu0 %v1525
    %v1544 = vpop.f32.mrf.mxu0
    %v1545 = vadd.f32 0.0, %v1544
    %1546 = vdwg.mxu0
    %v1547 = vld [vmem:[%s11] sm:$0xff]
    %v1548 = vld [vmem:[%s11 + $0x8] sm:$0xff]
    %v1549 = vld [vmem:[%s11 + $0x10] sm:$0xff]
    %v1550 = vld [vmem:[%s11 + $0x18] sm:$0xff]
    %s1551 = scalar_lea.vmem %s10, 2
    %v1552 = vld [vmem:[%s1551] sm:$0x1]
    %v1554 = vperm.slane %v1552, 0
    %v1557 = vsel %vm108, %v1545, 0
    %1559 = vmatpush.msra.mxu0 0.0
    %1560 = vmatpush.msra.mxu0 0.0
    %1561 = vmatpush.msra.mxu0 0.0
    %1562 = vmatpush.msra.mxu0 0.0
    %1563 = vmatpush.msra.mxu0 0.0
    %1564 = vmatpush.msra.mxu0 0.0
    %1565 = vmatpush.msra.mxu0 0.0
    %1566 = vmatpush.msra.mxu0 0.0
    %1567 = vmatpush.msra.mxu0 0.0
    %1568 = vmatpush.msra.mxu0 0.0
    %1569 = vmatpush.msra.mxu0 0.0
    %1570 = vmatpush.msra.mxu0 0.0
    %1571 = vmatpush.msra.mxu0 %v1550
    %1572 = vmatpush.msra.mxu0 %v1549
    %1573 = vmatpush.msra.mxu0 %v1548
    %1574 = vmatpush.msra.mxu0 %v1547
    %1575 = vmatmul.f32.gmra.mxu0 %v1557
    %v1576 = vpop.f32.mrf.mxu0
    %v1577 = vadd.f32 %v1554, %v1576
    %1578 = vdwg.mxu0
    %v1579 = vmax.f32 %v1577, 0.0
    %v1580 = vld [vmem:[%s12] sm:$0xff]
    %v1581 = vld [vmem:[%s12 + $0x8] sm:$0xff]
    %v1582 = vld [vmem:[%s12 + $0x10] sm:$0xff]
    %v1583 = vld [vmem:[%s12 + $0x18] sm:$0xff]
    %v1584 = vld [vmem:[%s13] sm:$0x1]
    %v1586 = vperm.slane %v1584, 0
    %v1589 = vsel %vm108, %v1579, 0
    %1591 = vmatpush.msra.mxu0 0.0
    %1592 = vmatpush.msra.mxu0 0.0
    %1593 = vmatpush.msra.mxu0 0.0
    %1594 = vmatpush.msra.mxu0 0.0
    %1595 = vmatpush.msra.mxu0 0.0
    %1596 = vmatpush.msra.mxu0 0.0
    %1597 = vmatpush.msra.mxu0 0.0
    %1598 = vmatpush.msra.mxu0 0.0
    %1599 = vmatpush.msra.mxu0 0.0
    %1600 = vmatpush.msra.mxu0 0.0
    %1601 = vmatpush.msra.mxu0 0.0
    %1602 = vmatpush.msra.mxu0 0.0
    %1603 = vmatpush.msra.mxu0 %v1583
    %1604 = vmatpush.msra.mxu0 %v1582
    %1605 = vmatpush.msra.mxu0 %v1581
    %1606 = vmatpush.msra.mxu0 %v1580
    %1607 = vmatmul.f32.gmra.mxu0 %v1589
    %v1608 = vpop.f32.mrf.mxu0
    %v1609 = vadd.f32 %v1586, %v1608
    %1610 = vdwg.mxu0
    %1611 = vst [vmem:[#allocation2] sm:$0x3] %v1609
    // Predicated region
    $region58: #{bert_classifier_forward.1} parent=1 // pred_check
      _
    $region59: #{bert_classifier_forward.1} parent=1 // pred_check_branch
      %1613 = sbr.rel (0) target = $region61
    $region60: #{bert_classifier_forward.1} parent=1 // pred_region
      %1615 = vsyncadd [#allocation3], 0
      %s1617 = sshll.u32 [#allocation2], 4
      %s1618 = int_to_ptr.vmem [resolvable:$true] %s1617
      %s1619 = sshll.u32 %s14, 4
      %s1620 = int_to_ptr.hbm [resolvable:$true] %s1619
      %1622 = dma.vmem_to_hbm [thread:$0]  %s1618, 32, %s1620, [#allocation3]
    $region61: #{bert_classifier_forward.1} parent=1 // pred_fallthru
      _
    // Predicated region
    $region62: #{bert_classifier_forward.1} parent=1 // pred_check
      _
    $region63: #{bert_classifier_forward.1} parent=1 // pred_check_branch
      %1624 = sbr.rel (0) target = $region65
    $region64: #{bert_classifier_forward.1} parent=1 // pred_region
      %1626 = dma.done [#allocation3], 32
    $region65: #{bert_classifier_forward.1} parent=1 // pred_fallthru
      _
    %1627 = vsyncpa [#allocation3], 1

</llo_original>
